<compile_context>
chip_gen: v5e
topology: v5e:2x2
jax: 0.10.0
libtpu: 0.0.40
codegen_flags: <defaults>
</compile_context>

<pallas_src>
import jax
import jax.numpy as jnp
from jax.experimental import pallas as pl
from jax.experimental.pallas import tpu as pltpu

_GRID = 8          # Mixed_7c spatial grid is 8x8
_B_TILE = 8        # images per grid step (raise to 16-32 for FID-sized batches)


def _partial_inception_kernel(x_ref, w_ref, o_ref):
    # x_ref: (B_TILE, P, K_pad) f32 patches in [0, 1] for B_TILE images
    # w_ref: (K_pad, C_OUT)     bf16, equals 2*W (preprocessing folded in)
    # o_ref: (B_TILE, C_OUT)    f32 pooled "Mixed_7c" activations
    pooled = jnp.mean(x_ref[...], axis=1)            # (B_TILE, K_pad) XLU reduce
    centered = pooled - 0.5                          # (2x-1)@W == (x-0.5)@(2W)
    o_ref[...] = jnp.dot(centered.astype(jnp.bfloat16), w_ref[...],
                         preferred_element_type=jnp.float32)


def partial_inception_network(x, w, *, b_tile=_B_TILE):
    """x: (N, C_in, H, W) float32 in [0, 1] (NCHW).  w: (K, C_out) float32.

    Returns (N, C_out) float32 — pooled 'Mixed_7c' activations of the linear
    stand-in backbone.
    """
    N, C_in, H, W_img = x.shape
    K, C_out = w.shape
    # TODO(synk): the real module accepts 299x299 (convolutions, not patches);
    # the stand-in patch projection needs H, W divisible by the 8x8 output grid.
    assert H % _GRID == 0 and W_img % _GRID == 0
    ph, pw = H // _GRID, W_img // _GRID
    assert K == ph * pw * C_in
    P = _GRID * _GRID

    # NCHW -> (N, P, K) patches; feature order inside a patch: (ph, pw, cin).
    # Kept inside the same jit as the kernel so XLA fuses it with cast/pad.
    patches = (
        x.reshape(N, C_in, _GRID, ph, _GRID, pw)
         .transpose(0, 2, 4, 3, 5, 1)                # (N, Gh, Gw, ph, pw, Cin)
         .reshape(N, P, K)
         .astype(jnp.float32)
    )

    # Pad the contraction dim to a multiple of 128 for clean (8,128) layouts.
    k_pad = ((K + 127) // 128) * 128
    if k_pad != K:
        patches = jnp.pad(patches, ((0, 0), (0, 0), (0, k_pad - K)))

    # Fold preprocessing into the weight and cast to bf16: (2x-1)@W == (x-0.5)@(2W)
    w2 = 2.0 * w.astype(jnp.float32)
    if k_pad != K:
        w2 = jnp.pad(w2, ((0, k_pad - K), (0, 0)))
    w2 = w2.astype(jnp.bfloat16)

    # Pad batch to a multiple of b_tile so every grid step is full.
    n_pad = ((N + b_tile - 1) // b_tile) * b_tile
    if n_pad != N:
        patches = jnp.pad(patches, ((0, n_pad - N), (0, 0), (0, 0)))

    cost = pl.CostEstimate(
        flops=2 * n_pad * k_pad * C_out + n_pad * P * k_pad,
        transcendentals=0,
        bytes_accessed=patches.size * 4 + w2.size * 2 + n_pad * C_out * 4,
    )

    out = pl.pallas_call(
        _partial_inception_kernel,
        out_shape=jax.ShapeDtypeStruct((n_pad, C_out), jnp.float32),
        grid_spec=pltpu.PrefetchScalarGridSpec(
            num_scalar_prefetch=0,
            grid=(n_pad // b_tile,),
            in_specs=[
                pl.BlockSpec((b_tile, P, k_pad), lambda i: (i, 0, 0)),
                # Grid-invariant weight block: fetched once, stays in VMEM.
                pl.BlockSpec((k_pad, C_out), lambda i: (0, 0)),
            ],
            out_specs=pl.BlockSpec((b_tile, C_out), lambda i: (i, 0)),
        ),
        compiler_params=pltpu.CompilerParams(
            dimension_semantics=("parallel",)),
        cost_estimate=cost,
    )(patches, w2)

    return out[:N]


if __name__ == "__main__":
    # Small shapes consistent with the module: N=2, 3 input channels,
    # spatial 64x64 (stands in for 299x299), output channels = 2048
    # (matching the module's (N, 2048) output).
    N, C_in, H, W_sp = 2, 3, 64, 64
    ph, pw = H // _GRID, W_sp // _GRID
    K = ph * pw * C_in                # 192
    C_OUT = 2048

    key = jax.random.PRNGKey(0)
    kx, kw = jax.random.split(key)
    x = jax.random.uniform(kx, (N, C_in, H, W_sp), dtype=jnp.float32)  # in [0,1]
    w = jax.random.normal(kw, (K, C_OUT), dtype=jnp.float32) * 0.02

    fwd = jax.jit(partial_inception_network)
    out = fwd(x, w)
    jax.block_until_ready(out)

    # Reference (module semantics with the linear stand-in backbone), f32 JAX.
    patches = (x.reshape(N, C_in, _GRID, ph, _GRID, pw)
                 .transpose(0, 2, 4, 3, 5, 1)
                 .reshape(N, _GRID * _GRID, K))
    ref = jnp.mean((patches * 2.0 - 1.0) @ w, axis=1)

    assert out.shape == (N, C_OUT) and out.dtype == jnp.float32
    max_err = float(jnp.max(jnp.abs(out - ref)))
    assert jnp.allclose(out, ref, atol=2e-3, rtol=2e-3), max_err

    print("KERNEL_OK")
</pallas_src>

<mosaic_0001>
module attributes {stable_mosaic.version = 11 : i64} {
  func.func @_partial_inception_kernel(%arg0: i32, %arg1: memref<8x64x256xf32, #tpu.memory_space<vmem>>, %arg2: memref<256x2048xbf16, #tpu.memory_space<vmem>>, %arg3: memref<8x2048xf32, #tpu.memory_space<vmem>>) attributes {dimension_semantics = [#tpu.dimension_semantics<parallel>], iteration_bounds = array<i64: 1>, scalar_prefetch = 0 : i64, scratch_operands = 0 : i64, tpu.core_type = #tpu.core_type<tc>, window_params = [{transform_indices = @transform_0, window_bounds = array<i64: 8, 64, 256>}, {pipeline_mode = #tpu.pipeline_mode<synchronous>, transform_indices = @transform_1, window_bounds = array<i64: 256, 2048>}, {transform_indices = @transform_2, window_bounds = array<i64: 8, 2048>}]} {
    %c0 = arith.constant 0 : index
    %c0_0 = arith.constant 0 : index
    %c0_1 = arith.constant 0 : index
    %0 = vector.load %arg1[%c0, %c0_0, %c0_1] : memref<8x64x256xf32, #tpu.memory_space<vmem>>, vector<8x64x256xf32>
    %cst = arith.constant dense<0.000000e+00> : vector<8x256xf32>
    %1 = vector.multi_reduction <add>, %0, %cst [1] : vector<8x64x256xf32> to vector<8x256xf32>
    %cst_2 = arith.constant 6.400000e+01 : f32
    %2 = vector.broadcast %cst_2 : f32 to vector<8x256xf32>
    %3 = arith.divf %1, %2 : vector<8x256xf32>
    %cst_3 = arith.constant 5.000000e-01 : f32
    %4 = vector.broadcast %cst_3 : f32 to vector<8x256xf32>
    %5 = arith.subf %3, %4 : vector<8x256xf32>
    %6 = arith.truncf %5 : vector<8x256xf32> to vector<8x256xbf16>
    %c0_4 = arith.constant 0 : index
    %c0_5 = arith.constant 0 : index
    %7 = vector.load %arg2[%c0_4, %c0_5] : memref<256x2048xbf16, #tpu.memory_space<vmem>>, vector<256x2048xbf16>
    %cst_6 = arith.constant dense<0.000000e+00> : vector<8x2048xf32>
    %8 = tpu.matmul %6, %7, %cst_6 {dimension_numbers = #tpu.dot_dimension_numbers<[1], [0], [0], [1], [0, 0, 1, 1], [], []>} : vector<8x256xbf16>, vector<256x2048xbf16>, vector<8x2048xf32> -> vector<8x2048xf32>
    %c0_7 = arith.constant 0 : index
    %c0_8 = arith.constant 0 : index
    %9 = vector.load %arg3[%c0_7, %c0_8] : memref<8x2048xf32, #tpu.memory_space<vmem>>, vector<8x2048xf32>
    tpu.vector_store %arg3[%c0_7, %c0_8], %8 {strides = array<i32>} : memref<8x2048xf32, #tpu.memory_space<vmem>>, vector<8x2048xf32>,
    return
  }
  func.func @transform_0(%arg0: i32) -> (i32, i32, i32) {
    %c0_i32 = arith.constant 0 : i32
    %c0_i32_0 = arith.constant 0 : i32
    %c0_i32_1 = arith.constant 0 : i32
    return %arg0, %c0_i32, %c0_i32_0 : i32, i32, i32
  }
  func.func @transform_1(%arg0: i32) -> (i32, i32) {
    %c0_i32 = arith.constant 0 : i32
    %c0_i32_0 = arith.constant 0 : i32
    %c0_i32_1 = arith.constant 0 : i32
    return %c0_i32, %c0_i32_0 : i32, i32
  }
  func.func @transform_2(%arg0: i32) -> (i32, i32) {
    %c0_i32 = arith.constant 0 : i32
    %c0_i32_0 = arith.constant 0 : i32
    return %arg0, %c0_i32 : i32, i32
  }
}

</mosaic_0001>

<llo_original>
// kernel: partial_inception_network.1
$region0: #{partial_inception_network.1}
  #allocation0 [shape = 'u32[]', space=smem, size = 0x4, offset = 0x4, fixed_abs, tag = 'smem constant byte address 0x4 - core index']
  #allocation1 [shape = 'u32[72,128]{1,0:T(1,128)}', space=vmem, size = 0x9000, scoped, tag = 'internal scratch']
  %s0 = inlined_call_operand.vmem [shape: f32[8,64,256], index: 0, kind: input, shape index: {}]
  %s1 = inlined_call_operand.vmem [shape: bf16[256,2048], index: 1, kind: input, shape index: {}]
  %s2 = inlined_call_operand.vmem [shape: f32[8,2048], index: 2, kind: output, shape index: {}]
  %s3 = sld [smem:[#allocation0]]
  $region18: #{partial_inception_network.1} parent=0
    _
  %s5 = ssub.s32 1, %s3
  %s6 = scalar_select 0, %s5, %s3
  // Predicated region
  $region2: #{partial_inception_network.1} parent=0 // pred_check
    _
  $region3: #{partial_inception_network.1} parent=0 // pred_check_branch
    %8 = sbr.rel (0) target = $region5
  $region4: #{partial_inception_network.1} parent=0 // pred_region
    _
  $region5: #{partial_inception_network.1} parent=0 // pred_fallthru
    _
  // Predicated region
  $region6: #{partial_inception_network.1} parent=0 // pred_check
    _
  $region7: #{partial_inception_network.1} parent=0 // pred_check_branch
    %10 = sbr.rel (0) target = $region9
  $region8: #{partial_inception_network.1} parent=0 // pred_region
    _
  $region9: #{partial_inception_network.1} parent=0 // pred_fallthru
    _
  %v11 = vld [vmem:[%s0] sm:$0xff]
  %v12 = vld [vmem:[%s0 + $0x8] sm:$0xff]
  %v13 = vld [vmem:[%s0 + $0x10] sm:$0xff]
  %v14 = vld [vmem:[%s0 + $0x18] sm:$0xff]
  %v15 = vld [vmem:[%s0 + $0x20] sm:$0xff]
  %v16 = vld [vmem:[%s0 + $0x28] sm:$0xff]
  %v17 = vld [vmem:[%s0 + $0x30] sm:$0xff]
  %v18 = vld [vmem:[%s0 + $0x38] sm:$0xff]
  %v19 = vld [vmem:[%s0 + $0x40] sm:$0xff]
  %v20 = vld [vmem:[%s0 + $0x48] sm:$0xff]
  %v21 = vld [vmem:[%s0 + $0x50] sm:$0xff]
  %v22 = vld [vmem:[%s0 + $0x58] sm:$0xff]
  %v23 = vld [vmem:[%s0 + $0x60] sm:$0xff]
  %v24 = vld [vmem:[%s0 + $0x68] sm:$0xff]
  %v25 = vld [vmem:[%s0 + $0x70] sm:$0xff]
  %v26 = vld [vmem:[%s0 + $0x78] sm:$0xff]
  %v27 = vld [vmem:[%s0 + $0x80] sm:$0xff]
  %v28 = vld [vmem:[%s0 + $0x88] sm:$0xff]
  %v29 = vld [vmem:[%s0 + $0x90] sm:$0xff]
  %v30 = vld [vmem:[%s0 + $0x98] sm:$0xff]
  %v31 = vld [vmem:[%s0 + $0xa0] sm:$0xff]
  %v32 = vld [vmem:[%s0 + $0xa8] sm:$0xff]
  %v33 = vld [vmem:[%s0 + $0xb0] sm:$0xff]
  %v34 = vld [vmem:[%s0 + $0xb8] sm:$0xff]
  %v35 = vld [vmem:[%s0 + $0xc0] sm:$0xff]
  %v36 = vld [vmem:[%s0 + $0xc8] sm:$0xff]
  %v37 = vld [vmem:[%s0 + $0xd0] sm:$0xff]
  %v38 = vld [vmem:[%s0 + $0xd8] sm:$0xff]
  %v39 = vld [vmem:[%s0 + $0xe0] sm:$0xff]
  %v40 = vld [vmem:[%s0 + $0xe8] sm:$0xff]
  %v41 = vld [vmem:[%s0 + $0xf0] sm:$0xff]
  %v42 = vld [vmem:[%s0 + $0xf8] sm:$0xff]
  %v43 = vld [vmem:[%s0 + $0x100] sm:$0xff]
  %v44 = vld [vmem:[%s0 + $0x108] sm:$0xff]
  %v45 = vld [vmem:[%s0 + $0x110] sm:$0xff]
  %v46 = vld [vmem:[%s0 + $0x118] sm:$0xff]
  %v47 = vld [vmem:[%s0 + $0x120] sm:$0xff]
  %v48 = vld [vmem:[%s0 + $0x128] sm:$0xff]
  %v49 = vld [vmem:[%s0 + $0x130] sm:$0xff]
  %v50 = vld [vmem:[%s0 + $0x138] sm:$0xff]
  %v51 = vld [vmem:[%s0 + $0x140] sm:$0xff]
  %v52 = vld [vmem:[%s0 + $0x148] sm:$0xff]
  %v53 = vld [vmem:[%s0 + $0x150] sm:$0xff]
  %v54 = vld [vmem:[%s0 + $0x158] sm:$0xff]
  %v55 = vld [vmem:[%s0 + $0x160] sm:$0xff]
  %v56 = vld [vmem:[%s0 + $0x168] sm:$0xff]
  %v57 = vld [vmem:[%s0 + $0x170] sm:$0xff]
  %v58 = vld [vmem:[%s0 + $0x178] sm:$0xff]
  %v59 = vld [vmem:[%s0 + $0x180] sm:$0xff]
  %v60 = vld [vmem:[%s0 + $0x188] sm:$0xff]
  %v61 = vld [vmem:[%s0 + $0x190] sm:$0xff]
  %v62 = vld [vmem:[%s0 + $0x198] sm:$0xff]
  %v63 = vld [vmem:[%s0 + $0x1a0] sm:$0xff]
  %v64 = vld [vmem:[%s0 + $0x1a8] sm:$0xff]
  %v65 = vld [vmem:[%s0 + $0x1b0] sm:$0xff]
  %v66 = vld [vmem:[%s0 + $0x1b8] sm:$0xff]
  %v67 = vld [vmem:[%s0 + $0x1c0] sm:$0xff]
  %v68 = vld [vmem:[%s0 + $0x1c8] sm:$0xff]
  %v69 = vld [vmem:[%s0 + $0x1d0] sm:$0xff]
  %v70 = vld [vmem:[%s0 + $0x1d8] sm:$0xff]
  %v71 = vld [vmem:[%s0 + $0x1e0] sm:$0xff]
  %v72 = vld [vmem:[%s0 + $0x1e8] sm:$0xff]
  %v73 = vld [vmem:[%s0 + $0x1f0] sm:$0xff]
  %v74 = vld [vmem:[%s0 + $0x1f8] sm:$0xff]
  %v75 = vld [vmem:[%s0 + $0x200] sm:$0xff]
  %v76 = vld [vmem:[%s0 + $0x208] sm:$0xff]
  %v77 = vld [vmem:[%s0 + $0x210] sm:$0xff]
  %v78 = vld [vmem:[%s0 + $0x218] sm:$0xff]
  %v79 = vld [vmem:[%s0 + $0x220] sm:$0xff]
  %v80 = vld [vmem:[%s0 + $0x228] sm:$0xff]
  %v81 = vld [vmem:[%s0 + $0x230] sm:$0xff]
  %v82 = vld [vmem:[%s0 + $0x238] sm:$0xff]
  %v83 = vld [vmem:[%s0 + $0x240] sm:$0xff]
  %v84 = vld [vmem:[%s0 + $0x248] sm:$0xff]
  %v85 = vld [vmem:[%s0 + $0x250] sm:$0xff]
  %v86 = vld [vmem:[%s0 + $0x258] sm:$0xff]
  %v87 = vld [vmem:[%s0 + $0x260] sm:$0xff]
  %v88 = vld [vmem:[%s0 + $0x268] sm:$0xff]
  %v89 = vld [vmem:[%s0 + $0x270] sm:$0xff]
  %v90 = vld [vmem:[%s0 + $0x278] sm:$0xff]
  %v91 = vld [vmem:[%s0 + $0x280] sm:$0xff]
  %v92 = vld [vmem:[%s0 + $0x288] sm:$0xff]
  %v93 = vld [vmem:[%s0 + $0x290] sm:$0xff]
  %v94 = vld [vmem:[%s0 + $0x298] sm:$0xff]
  %v95 = vld [vmem:[%s0 + $0x2a0] sm:$0xff]
  %v96 = vld [vmem:[%s0 + $0x2a8] sm:$0xff]
  %v97 = vld [vmem:[%s0 + $0x2b0] sm:$0xff]
  %v98 = vld [vmem:[%s0 + $0x2b8] sm:$0xff]
  %v99 = vld [vmem:[%s0 + $0x2c0] sm:$0xff]
  %v100 = vld [vmem:[%s0 + $0x2c8] sm:$0xff]
  %v101 = vld [vmem:[%s0 + $0x2d0] sm:$0xff]
  %v102 = vld [vmem:[%s0 + $0x2d8] sm:$0xff]
  %v103 = vld [vmem:[%s0 + $0x2e0] sm:$0xff]
  %v104 = vld [vmem:[%s0 + $0x2e8] sm:$0xff]
  %v105 = vld [vmem:[%s0 + $0x2f0] sm:$0xff]
  %v106 = vld [vmem:[%s0 + $0x2f8] sm:$0xff]
  %v107 = vld [vmem:[%s0 + $0x300] sm:$0xff]
  %v108 = vld [vmem:[%s0 + $0x308] sm:$0xff]
  %v109 = vld [vmem:[%s0 + $0x310] sm:$0xff]
  %v110 = vld [vmem:[%s0 + $0x318] sm:$0xff]
  %v111 = vld [vmem:[%s0 + $0x320] sm:$0xff]
  %v112 = vld [vmem:[%s0 + $0x328] sm:$0xff]
  %v113 = vld [vmem:[%s0 + $0x330] sm:$0xff]
  %v114 = vld [vmem:[%s0 + $0x338] sm:$0xff]
  %v115 = vld [vmem:[%s0 + $0x340] sm:$0xff]
  %v116 = vld [vmem:[%s0 + $0x348] sm:$0xff]
  %v117 = vld [vmem:[%s0 + $0x350] sm:$0xff]
  %v118 = vld [vmem:[%s0 + $0x358] sm:$0xff]
  %v119 = vld [vmem:[%s0 + $0x360] sm:$0xff]
  %v120 = vld [vmem:[%s0 + $0x368] sm:$0xff]
  %v121 = vld [vmem:[%s0 + $0x370] sm:$0xff]
  %v122 = vld [vmem:[%s0 + $0x378] sm:$0xff]
  %v123 = vld [vmem:[%s0 + $0x380] sm:$0xff]
  %v124 = vld [vmem:[%s0 + $0x388] sm:$0xff]
  %v125 = vld [vmem:[%s0 + $0x390] sm:$0xff]
  %v126 = vld [vmem:[%s0 + $0x398] sm:$0xff]
  %v127 = vld [vmem:[%s0 + $0x3a0] sm:$0xff]
  %v128 = vld [vmem:[%s0 + $0x3a8] sm:$0xff]
  %v129 = vld [vmem:[%s0 + $0x3b0] sm:$0xff]
  %v130 = vld [vmem:[%s0 + $0x3b8] sm:$0xff]
  %v131 = vld [vmem:[%s0 + $0x3c0] sm:$0xff]
  %v132 = vld [vmem:[%s0 + $0x3c8] sm:$0xff]
  %v133 = vld [vmem:[%s0 + $0x3d0] sm:$0xff]
  %v134 = vld [vmem:[%s0 + $0x3d8] sm:$0xff]
  %v135 = vld [vmem:[%s0 + $0x3e0] sm:$0xff]
  %v136 = vld [vmem:[%s0 + $0x3e8] sm:$0xff]
  %v137 = vld [vmem:[%s0 + $0x3f0] sm:$0xff]
  %v138 = vld [vmem:[%s0 + $0x3f8] sm:$0xff]
  %v139 = vadd.f32 %v11, %v13
  %v140 = vadd.f32 %v139, %v15
  %v141 = vadd.f32 %v140, %v17
  %v142 = vadd.f32 %v141, %v19
  %v143 = vadd.f32 %v142, %v21
  %v144 = vadd.f32 %v143, %v23
  %v145 = vadd.f32 %v144, %v25
  %v146 = vrot.slane %v145, 4
  %v147 = vadd.f32 %v145, %v146
  %v148 = vrot.slane %v147, 2
  %v149 = vadd.f32 %v147, %v148
  %v150 = vrot.slane %v149, 1
  %v151 = vadd.f32 %v149, %v150
  %v152 = vadd.f32 %v12, %v14
  %v153 = vadd.f32 %v152, %v16
  %v154 = vadd.f32 %v153, %v18
  %v155 = vadd.f32 %v154, %v20
  %v156 = vadd.f32 %v155, %v22
  %v157 = vadd.f32 %v156, %v24
  %v158 = vadd.f32 %v157, %v26
  %v159 = vrot.slane %v158, 4
  %v160 = vadd.f32 %v158, %v159
  %v161 = vrot.slane %v160, 2
  %v162 = vadd.f32 %v160, %v161
  %v163 = vrot.slane %v162, 1
  %v164 = vadd.f32 %v162, %v163
  %v165 = vadd.f32 %v27, %v29
  %v166 = vadd.f32 %v165, %v31
  %v167 = vadd.f32 %v166, %v33
  %v168 = vadd.f32 %v167, %v35
  %v169 = vadd.f32 %v168, %v37
  %v170 = vadd.f32 %v169, %v39
  %v171 = vadd.f32 %v170, %v41
  %v172 = vrot.slane %v171, 4
  %v173 = vadd.f32 %v171, %v172
  %v174 = vrot.slane %v173, 2
  %v175 = vadd.f32 %v173, %v174
  %v176 = vrot.slane %v175, 1
  %v177 = vadd.f32 %v175, %v176
  %v178 = vadd.f32 %v28, %v30
  %v179 = vadd.f32 %v178, %v32
  %v180 = vadd.f32 %v179, %v34
  %v181 = vadd.f32 %v180, %v36
  %v182 = vadd.f32 %v181, %v38
  %v183 = vadd.f32 %v182, %v40
  %v184 = vadd.f32 %v183, %v42
  %v185 = vrot.slane %v184, 4
  %v186 = vadd.f32 %v184, %v185
  %v187 = vrot.slane %v186, 2
  %v188 = vadd.f32 %v186, %v187
  %v189 = vrot.slane %v188, 1
  %v190 = vadd.f32 %v188, %v189
  %v191 = vadd.f32 %v43, %v45
  %v192 = vadd.f32 %v191, %v47
  %v193 = vadd.f32 %v192, %v49
  %v194 = vadd.f32 %v193, %v51
  %v195 = vadd.f32 %v194, %v53
  %v196 = vadd.f32 %v195, %v55
  %v197 = vadd.f32 %v196, %v57
  %v198 = vrot.slane %v197, 4
  %v199 = vadd.f32 %v197, %v198
  %v200 = vrot.slane %v199, 2
  %v201 = vadd.f32 %v199, %v200
  %v202 = vrot.slane %v201, 1
  %v203 = vadd.f32 %v201, %v202
  %v204 = vadd.f32 %v44, %v46
  %v205 = vadd.f32 %v204, %v48
  %v206 = vadd.f32 %v205, %v50
  %v207 = vadd.f32 %v206, %v52
  %v208 = vadd.f32 %v207, %v54
  %v209 = vadd.f32 %v208, %v56
  %v210 = vadd.f32 %v209, %v58
  %v211 = vrot.slane %v210, 4
  %v212 = vadd.f32 %v210, %v211
  %v213 = vrot.slane %v212, 2
  %v214 = vadd.f32 %v212, %v213
  %v215 = vrot.slane %v214, 1
  %v216 = vadd.f32 %v214, %v215
  %v217 = vadd.f32 %v59, %v61
  %v218 = vadd.f32 %v217, %v63
  %v219 = vadd.f32 %v218, %v65
  %v220 = vadd.f32 %v219, %v67
  %v221 = vadd.f32 %v220, %v69
  %v222 = vadd.f32 %v221, %v71
  %v223 = vadd.f32 %v222, %v73
  %v224 = vrot.slane %v223, 4
  %v225 = vadd.f32 %v223, %v224
  %v226 = vrot.slane %v225, 2
  %v227 = vadd.f32 %v225, %v226
  %v228 = vrot.slane %v227, 1
  %v229 = vadd.f32 %v227, %v228
  %v230 = vadd.f32 %v60, %v62
  %v231 = vadd.f32 %v230, %v64
  %v232 = vadd.f32 %v231, %v66
  %v233 = vadd.f32 %v232, %v68
  %v234 = vadd.f32 %v233, %v70
  %v235 = vadd.f32 %v234, %v72
  %v236 = vadd.f32 %v235, %v74
  %v237 = vrot.slane %v236, 4
  %v238 = vadd.f32 %v236, %v237
  %v239 = vrot.slane %v238, 2
  %v240 = vadd.f32 %v238, %v239
  %v241 = vrot.slane %v240, 1
  %v242 = vadd.f32 %v240, %v241
  %v243 = vadd.f32 %v75, %v77
  %v244 = vadd.f32 %v243, %v79
  %v245 = vadd.f32 %v244, %v81
  %v246 = vadd.f32 %v245, %v83
  %v247 = vadd.f32 %v246, %v85
  %v248 = vadd.f32 %v247, %v87
  %v249 = vadd.f32 %v248, %v89
  %v250 = vrot.slane %v249, 4
  %v251 = vadd.f32 %v249, %v250
  %v252 = vrot.slane %v251, 2
  %v253 = vadd.f32 %v251, %v252
  %v254 = vrot.slane %v253, 1
  %v255 = vadd.f32 %v253, %v254
  %v256 = vadd.f32 %v76, %v78
  %v257 = vadd.f32 %v256, %v80
  %v258 = vadd.f32 %v257, %v82
  %v259 = vadd.f32 %v258, %v84
  %v260 = vadd.f32 %v259, %v86
  %v261 = vadd.f32 %v260, %v88
  %v262 = vadd.f32 %v261, %v90
  %v263 = vrot.slane %v262, 4
  %v264 = vadd.f32 %v262, %v263
  %v265 = vrot.slane %v264, 2
  %v266 = vadd.f32 %v264, %v265
  %v267 = vrot.slane %v266, 1
  %v268 = vadd.f32 %v266, %v267
  %v269 = vadd.f32 %v91, %v93
  %v270 = vadd.f32 %v269, %v95
  %v271 = vadd.f32 %v270, %v97
  %v272 = vadd.f32 %v271, %v99
  %v273 = vadd.f32 %v272, %v101
  %v274 = vadd.f32 %v273, %v103
  %v275 = vadd.f32 %v274, %v105
  %v276 = vrot.slane %v275, 4
  %v277 = vadd.f32 %v275, %v276
  %v278 = vrot.slane %v277, 2
  %v279 = vadd.f32 %v277, %v278
  %v280 = vrot.slane %v279, 1
  %v281 = vadd.f32 %v279, %v280
  %v282 = vadd.f32 %v92, %v94
  %v283 = vadd.f32 %v282, %v96
  %v284 = vadd.f32 %v283, %v98
  %v285 = vadd.f32 %v284, %v100
  %v286 = vadd.f32 %v285, %v102
  %v287 = vadd.f32 %v286, %v104
  %v288 = vadd.f32 %v287, %v106
  %v289 = vrot.slane %v288, 4
  %v290 = vadd.f32 %v288, %v289
  %v291 = vrot.slane %v290, 2
  %v292 = vadd.f32 %v290, %v291
  %v293 = vrot.slane %v292, 1
  %v294 = vadd.f32 %v292, %v293
  %v295 = vadd.f32 %v107, %v109
  %v296 = vadd.f32 %v295, %v111
  %v297 = vadd.f32 %v296, %v113
  %v298 = vadd.f32 %v297, %v115
  %v299 = vadd.f32 %v298, %v117
  %v300 = vadd.f32 %v299, %v119
  %v301 = vadd.f32 %v300, %v121
  %v302 = vrot.slane %v301, 4
  %v303 = vadd.f32 %v301, %v302
  %v304 = vrot.slane %v303, 2
  %v305 = vadd.f32 %v303, %v304
  %v306 = vrot.slane %v305, 1
  %v307 = vadd.f32 %v305, %v306
  %v308 = vadd.f32 %v108, %v110
  %v309 = vadd.f32 %v308, %v112
  %v310 = vadd.f32 %v309, %v114
  %v311 = vadd.f32 %v310, %v116
  %v312 = vadd.f32 %v311, %v118
  %v313 = vadd.f32 %v312, %v120
  %v314 = vadd.f32 %v313, %v122
  %v315 = vrot.slane %v314, 4
  %v316 = vadd.f32 %v314, %v315
  %v317 = vrot.slane %v316, 2
  %v318 = vadd.f32 %v316, %v317
  %v319 = vrot.slane %v318, 1
  %v320 = vadd.f32 %v318, %v319
  %v321 = vadd.f32 %v123, %v125
  %v322 = vadd.f32 %v321, %v127
  %v323 = vadd.f32 %v322, %v129
  %v324 = vadd.f32 %v323, %v131
  %v325 = vadd.f32 %v324, %v133
  %v326 = vadd.f32 %v325, %v135
  %v327 = vadd.f32 %v326, %v137
  %v328 = vrot.slane %v327, 4
  %v329 = vadd.f32 %v327, %v328
  %v330 = vrot.slane %v329, 2
  %v331 = vadd.f32 %v329, %v330
  %v332 = vrot.slane %v331, 1
  %v333 = vadd.f32 %v331, %v332
  %v334 = vadd.f32 %v124, %v126
  %v335 = vadd.f32 %v334, %v128
  %v336 = vadd.f32 %v335, %v130
  %v337 = vadd.f32 %v336, %v132
  %v338 = vadd.f32 %v337, %v134
  %v339 = vadd.f32 %v338, %v136
  %v340 = vadd.f32 %v339, %v138
  %v341 = vrot.slane %v340, 4
  %v342 = vadd.f32 %v340, %v341
  %v343 = vrot.slane %v342, 2
  %v344 = vadd.f32 %v342, %v343
  %v345 = vrot.slane %v344, 1
  %v346 = vadd.f32 %v344, %v345
  %v347 = vrcp.pop 64.0
  %v348 = vmul.f32 64.0, %v347
  %v349 = vsub.f32 1.0, %v348
  %v350 = vmul.f32 %v347, %v349
  %v351 = vadd.f32 %v347, %v350
  %vm352 = vweird.f32 %v347
  %v353 = vsel %vm352, %v347, %v351
  %v354 = vmul.f32 %v151, %v353
  %v355 = vmul.f32 %v164, %v353
  %v356 = vmul.f32 %v177, %v353
  %v357 = vmul.f32 %v190, %v353
  %v358 = vmul.f32 %v203, %v353
  %v359 = vmul.f32 %v216, %v353
  %v360 = vmul.f32 %v229, %v353
  %v361 = vmul.f32 %v242, %v353
  %v362 = vmul.f32 %v255, %v353
  %v363 = vmul.f32 %v268, %v353
  %v364 = vmul.f32 %v281, %v353
  %v365 = vmul.f32 %v294, %v353
  %v366 = vmul.f32 %v307, %v353
  %v367 = vmul.f32 %v320, %v353
  %v368 = vmul.f32 %v333, %v353
  %v369 = vmul.f32 %v346, %v353
  %v370 = vsub.f32 %v354, 0.5
  %v371 = vsub.f32 %v355, 0.5
  %v372 = vsub.f32 %v356, 0.5
  %v373 = vsub.f32 %v357, 0.5
  %v374 = vsub.f32 %v358, 0.5
  %v375 = vsub.f32 %v359, 0.5
  %v376 = vsub.f32 %v360, 0.5
  %v377 = vsub.f32 %v361, 0.5
  %v378 = vsub.f32 %v362, 0.5
  %v379 = vsub.f32 %v363, 0.5
  %v380 = vsub.f32 %v364, 0.5
  %v381 = vsub.f32 %v365, 0.5
  %v382 = vsub.f32 %v366, 0.5
  %v383 = vsub.f32 %v367, 0.5
  %v384 = vsub.f32 %v368, 0.5
  %v385 = vsub.f32 %v369, 0.5
  %v386 = vpack.c.bf16 %v370, %v370
  %v387 = vpack.c.bf16 %v371, %v371
  %v388 = vpack.c.bf16 %v372, %v372
  %v389 = vpack.c.bf16 %v373, %v373
  %v390 = vpack.c.bf16 %v374, %v374
  %v391 = vpack.c.bf16 %v375, %v375
  %v392 = vpack.c.bf16 %v376, %v376
  %v393 = vpack.c.bf16 %v377, %v377
  %v394 = vpack.c.bf16 %v378, %v378
  %v395 = vpack.c.bf16 %v379, %v379
  %v396 = vpack.c.bf16 %v380, %v380
  %v397 = vpack.c.bf16 %v381, %v381
  %v398 = vpack.c.bf16 %v382, %v382
  %v399 = vpack.c.bf16 %v383, %v383
  %v400 = vpack.c.bf16 %v384, %v384
  %v401 = vpack.c.bf16 %v385, %v385
  %v402 = vld [vmem:[%s1] sm:$0xff]
  %v403 = vld [vmem:[%s1 + $0x8] sm:$0xff]
  %v404 = vld [vmem:[%s1 + $0x10] sm:$0xff]
  %v405 = vld [vmem:[%s1 + $0x18] sm:$0xff]
  %v406 = vld [vmem:[%s1 + $0x20] sm:$0xff]
  %v407 = vld [vmem:[%s1 + $0x28] sm:$0xff]
  %v408 = vld [vmem:[%s1 + $0x30] sm:$0xff]
  %v409 = vld [vmem:[%s1 + $0x38] sm:$0xff]
  %v410 = vld [vmem:[%s1 + $0x40] sm:$0xff]
  %v411 = vld [vmem:[%s1 + $0x48] sm:$0xff]
  %v412 = vld [vmem:[%s1 + $0x50] sm:$0xff]
  %v413 = vld [vmem:[%s1 + $0x58] sm:$0xff]
  %v414 = vld [vmem:[%s1 + $0x60] sm:$0xff]
  %v415 = vld [vmem:[%s1 + $0x68] sm:$0xff]
  %v416 = vld [vmem:[%s1 + $0x70] sm:$0xff]
  %v417 = vld [vmem:[%s1 + $0x78] sm:$0xff]
  %v418 = vld [vmem:[%s1 + $0x80] sm:$0xff]
  %v419 = vld [vmem:[%s1 + $0x88] sm:$0xff]
  %v420 = vld [vmem:[%s1 + $0x90] sm:$0xff]
  %v421 = vld [vmem:[%s1 + $0x98] sm:$0xff]
  %v422 = vld [vmem:[%s1 + $0xa0] sm:$0xff]
  %v423 = vld [vmem:[%s1 + $0xa8] sm:$0xff]
  %v424 = vld [vmem:[%s1 + $0xb0] sm:$0xff]
  %v425 = vld [vmem:[%s1 + $0xb8] sm:$0xff]
  %v426 = vld [vmem:[%s1 + $0xc0] sm:$0xff]
  %v427 = vld [vmem:[%s1 + $0xc8] sm:$0xff]
  %v428 = vld [vmem:[%s1 + $0xd0] sm:$0xff]
  %v429 = vld [vmem:[%s1 + $0xd8] sm:$0xff]
  %v430 = vld [vmem:[%s1 + $0xe0] sm:$0xff]
  %v431 = vld [vmem:[%s1 + $0xe8] sm:$0xff]
  %v432 = vld [vmem:[%s1 + $0xf0] sm:$0xff]
  %v433 = vld [vmem:[%s1 + $0xf8] sm:$0xff]
  %v434 = vld [vmem:[%s1 + $0x100] sm:$0xff]
  %v435 = vld [vmem:[%s1 + $0x108] sm:$0xff]
  %v436 = vld [vmem:[%s1 + $0x110] sm:$0xff]
  %v437 = vld [vmem:[%s1 + $0x118] sm:$0xff]
  %v438 = vld [vmem:[%s1 + $0x120] sm:$0xff]
  %v439 = vld [vmem:[%s1 + $0x128] sm:$0xff]
  %v440 = vld [vmem:[%s1 + $0x130] sm:$0xff]
  %v441 = vld [vmem:[%s1 + $0x138] sm:$0xff]
  %v442 = vld [vmem:[%s1 + $0x140] sm:$0xff]
  %v443 = vld [vmem:[%s1 + $0x148] sm:$0xff]
  %v444 = vld [vmem:[%s1 + $0x150] sm:$0xff]
  %v445 = vld [vmem:[%s1 + $0x158] sm:$0xff]
  %v446 = vld [vmem:[%s1 + $0x160] sm:$0xff]
  %v447 = vld [vmem:[%s1 + $0x168] sm:$0xff]
  %v448 = vld [vmem:[%s1 + $0x170] sm:$0xff]
  %v449 = vld [vmem:[%s1 + $0x178] sm:$0xff]
  %v450 = vld [vmem:[%s1 + $0x180] sm:$0xff]
  %v451 = vld [vmem:[%s1 + $0x188] sm:$0xff]
  %v452 = vld [vmem:[%s1 + $0x190] sm:$0xff]
  %v453 = vld [vmem:[%s1 + $0x198] sm:$0xff]
  %v454 = vld [vmem:[%s1 + $0x1a0] sm:$0xff]
  %v455 = vld [vmem:[%s1 + $0x1a8] sm:$0xff]
  %v456 = vld [vmem:[%s1 + $0x1b0] sm:$0xff]
  %v457 = vld [vmem:[%s1 + $0x1b8] sm:$0xff]
  %v458 = vld [vmem:[%s1 + $0x1c0] sm:$0xff]
  %v459 = vld [vmem:[%s1 + $0x1c8] sm:$0xff]
  %v460 = vld [vmem:[%s1 + $0x1d0] sm:$0xff]
  %v461 = vld [vmem:[%s1 + $0x1d8] sm:$0xff]
  %v462 = vld [vmem:[%s1 + $0x1e0] sm:$0xff]
  %v463 = vld [vmem:[%s1 + $0x1e8] sm:$0xff]
  %v464 = vld [vmem:[%s1 + $0x1f0] sm:$0xff]
  %v465 = vld [vmem:[%s1 + $0x1f8] sm:$0xff]
  %v466 = vld [vmem:[%s1 + $0x200] sm:$0xff]
  %v467 = vld [vmem:[%s1 + $0x208] sm:$0xff]
  %v468 = vld [vmem:[%s1 + $0x210] sm:$0xff]
  %v469 = vld [vmem:[%s1 + $0x218] sm:$0xff]
  %v470 = vld [vmem:[%s1 + $0x220] sm:$0xff]
  %v471 = vld [vmem:[%s1 + $0x228] sm:$0xff]
  %v472 = vld [vmem:[%s1 + $0x230] sm:$0xff]
  %v473 = vld [vmem:[%s1 + $0x238] sm:$0xff]
  %v474 = vld [vmem:[%s1 + $0x240] sm:$0xff]
  %v475 = vld [vmem:[%s1 + $0x248] sm:$0xff]
  %v476 = vld [vmem:[%s1 + $0x250] sm:$0xff]
  %v477 = vld [vmem:[%s1 + $0x258] sm:$0xff]
  %v478 = vld [vmem:[%s1 + $0x260] sm:$0xff]
  %v479 = vld [vmem:[%s1 + $0x268] sm:$0xff]
  %v480 = vld [vmem:[%s1 + $0x270] sm:$0xff]
  %v481 = vld [vmem:[%s1 + $0x278] sm:$0xff]
  %v482 = vld [vmem:[%s1 + $0x280] sm:$0xff]
  %v483 = vld [vmem:[%s1 + $0x288] sm:$0xff]
  %v484 = vld [vmem:[%s1 + $0x290] sm:$0xff]
  %v485 = vld [vmem:[%s1 + $0x298] sm:$0xff]
  %v486 = vld [vmem:[%s1 + $0x2a0] sm:$0xff]
  %v487 = vld [vmem:[%s1 + $0x2a8] sm:$0xff]
  %v488 = vld [vmem:[%s1 + $0x2b0] sm:$0xff]
  %v489 = vld [vmem:[%s1 + $0x2b8] sm:$0xff]
  %v490 = vld [vmem:[%s1 + $0x2c0] sm:$0xff]
  %v491 = vld [vmem:[%s1 + $0x2c8] sm:$0xff]
  %v492 = vld [vmem:[%s1 + $0x2d0] sm:$0xff]
  %v493 = vld [vmem:[%s1 + $0x2d8] sm:$0xff]
  %v494 = vld [vmem:[%s1 + $0x2e0] sm:$0xff]
  %v495 = vld [vmem:[%s1 + $0x2e8] sm:$0xff]
  %v496 = vld [vmem:[%s1 + $0x2f0] sm:$0xff]
  %v497 = vld [vmem:[%s1 + $0x2f8] sm:$0xff]
  %v498 = vld [vmem:[%s1 + $0x300] sm:$0xff]
  %v499 = vld [vmem:[%s1 + $0x308] sm:$0xff]
  %v500 = vld [vmem:[%s1 + $0x310] sm:$0xff]
  %v501 = vld [vmem:[%s1 + $0x318] sm:$0xff]
  %v502 = vld [vmem:[%s1 + $0x320] sm:$0xff]
  %v503 = vld [vmem:[%s1 + $0x328] sm:$0xff]
  %v504 = vld [vmem:[%s1 + $0x330] sm:$0xff]
  %v505 = vld [vmem:[%s1 + $0x338] sm:$0xff]
  %v506 = vld [vmem:[%s1 + $0x340] sm:$0xff]
  %v507 = vld [vmem:[%s1 + $0x348] sm:$0xff]
  %v508 = vld [vmem:[%s1 + $0x350] sm:$0xff]
  %v509 = vld [vmem:[%s1 + $0x358] sm:$0xff]
  %v510 = vld [vmem:[%s1 + $0x360] sm:$0xff]
  %v511 = vld [vmem:[%s1 + $0x368] sm:$0xff]
  %v512 = vld [vmem:[%s1 + $0x370] sm:$0xff]
  %v513 = vld [vmem:[%s1 + $0x378] sm:$0xff]
  %v514 = vld [vmem:[%s1 + $0x380] sm:$0xff]
  %v515 = vld [vmem:[%s1 + $0x388] sm:$0xff]
  %v516 = vld [vmem:[%s1 + $0x390] sm:$0xff]
  %v517 = vld [vmem:[%s1 + $0x398] sm:$0xff]
  %v518 = vld [vmem:[%s1 + $0x3a0] sm:$0xff]
  %v519 = vld [vmem:[%s1 + $0x3a8] sm:$0xff]
  %v520 = vld [vmem:[%s1 + $0x3b0] sm:$0xff]
  %v521 = vld [vmem:[%s1 + $0x3b8] sm:$0xff]
  %v522 = vld [vmem:[%s1 + $0x3c0] sm:$0xff]
  %v523 = vld [vmem:[%s1 + $0x3c8] sm:$0xff]
  %v524 = vld [vmem:[%s1 + $0x3d0] sm:$0xff]
  %v525 = vld [vmem:[%s1 + $0x3d8] sm:$0xff]
  %v526 = vld [vmem:[%s1 + $0x3e0] sm:$0xff]
  %v527 = vld [vmem:[%s1 + $0x3e8] sm:$0xff]
  %v528 = vld [vmem:[%s1 + $0x3f0] sm:$0xff]
  %v529 = vld [vmem:[%s1 + $0x3f8] sm:$0xff]
  %v530 = vld [vmem:[%s1 + $0x400] sm:$0xff]
  %v531 = vld [vmem:[%s1 + $0x408] sm:$0xff]
  %v532 = vld [vmem:[%s1 + $0x410] sm:$0xff]
  %v533 = vld [vmem:[%s1 + $0x418] sm:$0xff]
  %v534 = vld [vmem:[%s1 + $0x420] sm:$0xff]
  %v535 = vld [vmem:[%s1 + $0x428] sm:$0xff]
  %v536 = vld [vmem:[%s1 + $0x430] sm:$0xff]
  %v537 = vld [vmem:[%s1 + $0x438] sm:$0xff]
  %v538 = vld [vmem:[%s1 + $0x440] sm:$0xff]
  %v539 = vld [vmem:[%s1 + $0x448] sm:$0xff]
  %v540 = vld [vmem:[%s1 + $0x450] sm:$0xff]
  %v541 = vld [vmem:[%s1 + $0x458] sm:$0xff]
  %v542 = vld [vmem:[%s1 + $0x460] sm:$0xff]
  %v543 = vld [vmem:[%s1 + $0x468] sm:$0xff]
  %v544 = vld [vmem:[%s1 + $0x470] sm:$0xff]
  %v545 = vld [vmem:[%s1 + $0x478] sm:$0xff]
  %v546 = vld [vmem:[%s1 + $0x480] sm:$0xff]
  %v547 = vld [vmem:[%s1 + $0x488] sm:$0xff]
  %v548 = vld [vmem:[%s1 + $0x490] sm:$0xff]
  %v549 = vld [vmem:[%s1 + $0x498] sm:$0xff]
  %v550 = vld [vmem:[%s1 + $0x4a0] sm:$0xff]
  %v551 = vld [vmem:[%s1 + $0x4a8] sm:$0xff]
  %v552 = vld [vmem:[%s1 + $0x4b0] sm:$0xff]
  %v553 = vld [vmem:[%s1 + $0x4b8] sm:$0xff]
  %v554 = vld [vmem:[%s1 + $0x4c0] sm:$0xff]
  %v555 = vld [vmem:[%s1 + $0x4c8] sm:$0xff]
  %v556 = vld [vmem:[%s1 + $0x4d0] sm:$0xff]
  %v557 = vld [vmem:[%s1 + $0x4d8] sm:$0xff]
  %v558 = vld [vmem:[%s1 + $0x4e0] sm:$0xff]
  %v559 = vld [vmem:[%s1 + $0x4e8] sm:$0xff]
  %v560 = vld [vmem:[%s1 + $0x4f0] sm:$0xff]
  %v561 = vld [vmem:[%s1 + $0x4f8] sm:$0xff]
  %v562 = vld [vmem:[%s1 + $0x500] sm:$0xff]
  %v563 = vld [vmem:[%s1 + $0x508] sm:$0xff]
  %v564 = vld [vmem:[%s1 + $0x510] sm:$0xff]
  %v565 = vld [vmem:[%s1 + $0x518] sm:$0xff]
  %v566 = vld [vmem:[%s1 + $0x520] sm:$0xff]
  %v567 = vld [vmem:[%s1 + $0x528] sm:$0xff]
  %v568 = vld [vmem:[%s1 + $0x530] sm:$0xff]
  %v569 = vld [vmem:[%s1 + $0x538] sm:$0xff]
  %v570 = vld [vmem:[%s1 + $0x540] sm:$0xff]
  %v571 = vld [vmem:[%s1 + $0x548] sm:$0xff]
  %v572 = vld [vmem:[%s1 + $0x550] sm:$0xff]
  %v573 = vld [vmem:[%s1 + $0x558] sm:$0xff]
  %v574 = vld [vmem:[%s1 + $0x560] sm:$0xff]
  %v575 = vld [vmem:[%s1 + $0x568] sm:$0xff]
  %v576 = vld [vmem:[%s1 + $0x570] sm:$0xff]
  %v577 = vld [vmem:[%s1 + $0x578] sm:$0xff]
  %v578 = vld [vmem:[%s1 + $0x580] sm:$0xff]
  %v579 = vld [vmem:[%s1 + $0x588] sm:$0xff]
  %v580 = vld [vmem:[%s1 + $0x590] sm:$0xff]
  %v581 = vld [vmem:[%s1 + $0x598] sm:$0xff]
  %v582 = vld [vmem:[%s1 + $0x5a0] sm:$0xff]
  %v583 = vld [vmem:[%s1 + $0x5a8] sm:$0xff]
  %v584 = vld [vmem:[%s1 + $0x5b0] sm:$0xff]
  %v585 = vld [vmem:[%s1 + $0x5b8] sm:$0xff]
  %v586 = vld [vmem:[%s1 + $0x5c0] sm:$0xff]
  %v587 = vld [vmem:[%s1 + $0x5c8] sm:$0xff]
  %v588 = vld [vmem:[%s1 + $0x5d0] sm:$0xff]
  %v589 = vld [vmem:[%s1 + $0x5d8] sm:$0xff]
  %v590 = vld [vmem:[%s1 + $0x5e0] sm:$0xff]
  %v591 = vld [vmem:[%s1 + $0x5e8] sm:$0xff]
  %v592 = vld [vmem:[%s1 + $0x5f0] sm:$0xff]
  %v593 = vld [vmem:[%s1 + $0x5f8] sm:$0xff]
  %v594 = vld [vmem:[%s1 + $0x600] sm:$0xff]
  %v595 = vld [vmem:[%s1 + $0x608] sm:$0xff]
  %v596 = vld [vmem:[%s1 + $0x610] sm:$0xff]
  %v597 = vld [vmem:[%s1 + $0x618] sm:$0xff]
  %v598 = vld [vmem:[%s1 + $0x620] sm:$0xff]
  %v599 = vld [vmem:[%s1 + $0x628] sm:$0xff]
  %v600 = vld [vmem:[%s1 + $0x630] sm:$0xff]
  %v601 = vld [vmem:[%s1 + $0x638] sm:$0xff]
  %v602 = vld [vmem:[%s1 + $0x640] sm:$0xff]
  %v603 = vld [vmem:[%s1 + $0x648] sm:$0xff]
  %v604 = vld [vmem:[%s1 + $0x650] sm:$0xff]
  %v605 = vld [vmem:[%s1 + $0x658] sm:$0xff]
  %v606 = vld [vmem:[%s1 + $0x660] sm:$0xff]
  %v607 = vld [vmem:[%s1 + $0x668] sm:$0xff]
  %v608 = vld [vmem:[%s1 + $0x670] sm:$0xff]
  %v609 = vld [vmem:[%s1 + $0x678] sm:$0xff]
  %v610 = vld [vmem:[%s1 + $0x680] sm:$0xff]
  %v611 = vld [vmem:[%s1 + $0x688] sm:$0xff]
  %v612 = vld [vmem:[%s1 + $0x690] sm:$0xff]
  %v613 = vld [vmem:[%s1 + $0x698] sm:$0xff]
  %v614 = vld [vmem:[%s1 + $0x6a0] sm:$0xff]
  %v615 = vld [vmem:[%s1 + $0x6a8] sm:$0xff]
  %v616 = vld [vmem:[%s1 + $0x6b0] sm:$0xff]
  %v617 = vld [vmem:[%s1 + $0x6b8] sm:$0xff]
  %v618 = vld [vmem:[%s1 + $0x6c0] sm:$0xff]
  %v619 = vld [vmem:[%s1 + $0x6c8] sm:$0xff]
  %v620 = vld [vmem:[%s1 + $0x6d0] sm:$0xff]
  %v621 = vld [vmem:[%s1 + $0x6d8] sm:$0xff]
  %v622 = vld [vmem:[%s1 + $0x6e0] sm:$0xff]
  %v623 = vld [vmem:[%s1 + $0x6e8] sm:$0xff]
  %v624 = vld [vmem:[%s1 + $0x6f0] sm:$0xff]
  %v625 = vld [vmem:[%s1 + $0x6f8] sm:$0xff]
  %v626 = vld [vmem:[%s1 + $0x700] sm:$0xff]
  %v627 = vld [vmem:[%s1 + $0x708] sm:$0xff]
  %v628 = vld [vmem:[%s1 + $0x710] sm:$0xff]
  %v629 = vld [vmem:[%s1 + $0x718] sm:$0xff]
  %v630 = vld [vmem:[%s1 + $0x720] sm:$0xff]
  %v631 = vld [vmem:[%s1 + $0x728] sm:$0xff]
  %v632 = vld [vmem:[%s1 + $0x730] sm:$0xff]
  %v633 = vld [vmem:[%s1 + $0x738] sm:$0xff]
  %v634 = vld [vmem:[%s1 + $0x740] sm:$0xff]
  %v635 = vld [vmem:[%s1 + $0x748] sm:$0xff]
  %v636 = vld [vmem:[%s1 + $0x750] sm:$0xff]
  %v637 = vld [vmem:[%s1 + $0x758] sm:$0xff]
  %v638 = vld [vmem:[%s1 + $0x760] sm:$0xff]
  %v639 = vld [vmem:[%s1 + $0x768] sm:$0xff]
  %v640 = vld [vmem:[%s1 + $0x770] sm:$0xff]
  %v641 = vld [vmem:[%s1 + $0x778] sm:$0xff]
  %v642 = vld [vmem:[%s1 + $0x780] sm:$0xff]
  %v643 = vld [vmem:[%s1 + $0x788] sm:$0xff]
  %v644 = vld [vmem:[%s1 + $0x790] sm:$0xff]
  %v645 = vld [vmem:[%s1 + $0x798] sm:$0xff]
  %v646 = vld [vmem:[%s1 + $0x7a0] sm:$0xff]
  %v647 = vld [vmem:[%s1 + $0x7a8] sm:$0xff]
  %v648 = vld [vmem:[%s1 + $0x7b0] sm:$0xff]
  %v649 = vld [vmem:[%s1 + $0x7b8] sm:$0xff]
  %v650 = vld [vmem:[%s1 + $0x7c0] sm:$0xff]
  %v651 = vld [vmem:[%s1 + $0x7c8] sm:$0xff]
  %v652 = vld [vmem:[%s1 + $0x7d0] sm:$0xff]
  %v653 = vld [vmem:[%s1 + $0x7d8] sm:$0xff]
  %v654 = vld [vmem:[%s1 + $0x7e0] sm:$0xff]
  %v655 = vld [vmem:[%s1 + $0x7e8] sm:$0xff]
  %v656 = vld [vmem:[%s1 + $0x7f0] sm:$0xff]
  %v657 = vld [vmem:[%s1 + $0x7f8] sm:$0xff]
  %v674 = vunpack.c.l.b16 %v386
  %v675 = vunpack.c.l.b16 %v387
  %v676 = vunpack.c.l.b16 %v388
  %v677 = vunpack.c.l.b16 %v389
  %v678 = vunpack.c.l.b16 %v390
  %v679 = vunpack.c.l.b16 %v391
  %v680 = vunpack.c.l.b16 %v392
  %v681 = vunpack.c.l.b16 %v393
  %v682 = vunpack.c.l.b16 %v394
  %v683 = vunpack.c.l.b16 %v395
  %v684 = vunpack.c.l.b16 %v396
  %v685 = vunpack.c.l.b16 %v397
  %v686 = vunpack.c.l.b16 %v398
  %v687 = vunpack.c.l.b16 %v399
  %v688 = vunpack.c.l.b16 %v400
  %v689 = vunpack.c.l.b16 %v401
  %vm690 = vcmask 1041409
  %v691 = vsel %vm690, %v676, %v674
  %vm692 = vcmask 1042434
  %v693 = vsel %vm692, %v678, %v691
  %vm694 = vcmask 1043459
  %v695 = vsel %vm694, %v680, %v693
  %vm696 = vcmask 1044484
  %v697 = vsel %vm696, %v682, %v695
  %vm698 = vcmask 1045509
  %v699 = vsel %vm698, %v684, %v697
  %vm700 = vcmask 1046534
  %v701 = vsel %vm700, %v686, %v699
  %vm702 = vcmask 1047559
  %v703 = vsel %vm702, %v688, %v701
  %v704 = vsel %vm690, %v677, %v675
  %v705 = vsel %vm692, %v679, %v704
  %v706 = vsel %vm694, %v681, %v705
  %v707 = vsel %vm696, %v683, %v706
  %v708 = vsel %vm698, %v685, %v707
  %v709 = vsel %vm700, %v687, %v708
  %v710 = vsel %vm702, %v689, %v709
  %v711 = vpack.c.b16 %v703, %v703
  %v712 = vpack.c.b16 %v710, %v710
  %v971 = vunpack.c.l.b16 %v402
  %v972 = vunpack.c.h.b16 %v402
  %v973 = vunpack.c.l.b16 %v403
  %v974 = vunpack.c.h.b16 %v403
  %v975 = vunpack.c.l.b16 %v404
  %v976 = vunpack.c.h.b16 %v404
  %v977 = vunpack.c.l.b16 %v405
  %v978 = vunpack.c.h.b16 %v405
  %v979 = vunpack.c.l.b16 %v406
  %v980 = vunpack.c.h.b16 %v406
  %v981 = vunpack.c.l.b16 %v407
  %v982 = vunpack.c.h.b16 %v407
  %v983 = vunpack.c.l.b16 %v408
  %v984 = vunpack.c.h.b16 %v408
  %v985 = vunpack.c.l.b16 %v409
  %v986 = vunpack.c.h.b16 %v409
  %v987 = vunpack.c.l.b16 %v410
  %v988 = vunpack.c.h.b16 %v410
  %v989 = vunpack.c.l.b16 %v411
  %v990 = vunpack.c.h.b16 %v411
  %v991 = vunpack.c.l.b16 %v412
  %v992 = vunpack.c.h.b16 %v412
  %v993 = vunpack.c.l.b16 %v413
  %v994 = vunpack.c.h.b16 %v413
  %v995 = vunpack.c.l.b16 %v414
  %v996 = vunpack.c.h.b16 %v414
  %v997 = vunpack.c.l.b16 %v415
  %v998 = vunpack.c.h.b16 %v415
  %v999 = vunpack.c.l.b16 %v416
  %v1000 = vunpack.c.h.b16 %v416
  %v1001 = vunpack.c.l.b16 %v417
  %v1002 = vunpack.c.h.b16 %v417
  %v1003 = vunpack.c.l.b16 %v418
  %v1004 = vunpack.c.h.b16 %v418
  %v1005 = vunpack.c.l.b16 %v419
  %v1006 = vunpack.c.h.b16 %v419
  %v1007 = vunpack.c.l.b16 %v420
  %v1008 = vunpack.c.h.b16 %v420
  %v1009 = vunpack.c.l.b16 %v421
  %v1010 = vunpack.c.h.b16 %v421
  %v1011 = vunpack.c.l.b16 %v422
  %v1012 = vunpack.c.h.b16 %v422
  %v1013 = vunpack.c.l.b16 %v423
  %v1014 = vunpack.c.h.b16 %v423
  %v1015 = vunpack.c.l.b16 %v424
  %v1016 = vunpack.c.h.b16 %v424
  %v1017 = vunpack.c.l.b16 %v425
  %v1018 = vunpack.c.h.b16 %v425
  %v1019 = vunpack.c.l.b16 %v426
  %v1020 = vunpack.c.h.b16 %v426
  %v1021 = vunpack.c.l.b16 %v427
  %v1022 = vunpack.c.h.b16 %v427
  %v1023 = vunpack.c.l.b16 %v428
  %v1024 = vunpack.c.h.b16 %v428
  %v1025 = vunpack.c.l.b16 %v429
  %v1026 = vunpack.c.h.b16 %v429
  %v1027 = vunpack.c.l.b16 %v430
  %v1028 = vunpack.c.h.b16 %v430
  %v1029 = vunpack.c.l.b16 %v431
  %v1030 = vunpack.c.h.b16 %v431
  %v1031 = vunpack.c.l.b16 %v432
  %v1032 = vunpack.c.h.b16 %v432
  %v1033 = vunpack.c.l.b16 %v433
  %v1034 = vunpack.c.h.b16 %v433
  %v1035 = vunpack.c.l.b16 %v434
  %v1036 = vunpack.c.h.b16 %v434
  %v1037 = vunpack.c.l.b16 %v435
  %v1038 = vunpack.c.h.b16 %v435
  %v1039 = vunpack.c.l.b16 %v436
  %v1040 = vunpack.c.h.b16 %v436
  %v1041 = vunpack.c.l.b16 %v437
  %v1042 = vunpack.c.h.b16 %v437
  %v1043 = vunpack.c.l.b16 %v438
  %v1044 = vunpack.c.h.b16 %v438
  %v1045 = vunpack.c.l.b16 %v439
  %v1046 = vunpack.c.h.b16 %v439
  %v1047 = vunpack.c.l.b16 %v440
  %v1048 = vunpack.c.h.b16 %v440
  %v1049 = vunpack.c.l.b16 %v441
  %v1050 = vunpack.c.h.b16 %v441
  %v1051 = vunpack.c.l.b16 %v442
  %v1052 = vunpack.c.h.b16 %v442
  %v1053 = vunpack.c.l.b16 %v443
  %v1054 = vunpack.c.h.b16 %v443
  %v1055 = vunpack.c.l.b16 %v444
  %v1056 = vunpack.c.h.b16 %v444
  %v1057 = vunpack.c.l.b16 %v445
  %v1058 = vunpack.c.h.b16 %v445
  %v1059 = vunpack.c.l.b16 %v446
  %v1060 = vunpack.c.h.b16 %v446
  %v1061 = vunpack.c.l.b16 %v447
  %v1062 = vunpack.c.h.b16 %v447
  %v1063 = vunpack.c.l.b16 %v448
  %v1064 = vunpack.c.h.b16 %v448
  %v1065 = vunpack.c.l.b16 %v449
  %v1066 = vunpack.c.h.b16 %v449
  %v1067 = vunpack.c.l.b16 %v450
  %v1068 = vunpack.c.h.b16 %v450
  %v1069 = vunpack.c.l.b16 %v451
  %v1070 = vunpack.c.h.b16 %v451
  %v1071 = vunpack.c.l.b16 %v452
  %v1072 = vunpack.c.h.b16 %v452
  %v1073 = vunpack.c.l.b16 %v453
  %v1074 = vunpack.c.h.b16 %v453
  %v1075 = vunpack.c.l.b16 %v454
  %v1076 = vunpack.c.h.b16 %v454
  %v1077 = vunpack.c.l.b16 %v455
  %v1078 = vunpack.c.h.b16 %v455
  %v1079 = vunpack.c.l.b16 %v456
  %v1080 = vunpack.c.h.b16 %v456
  %v1081 = vunpack.c.l.b16 %v457
  %v1082 = vunpack.c.h.b16 %v457
  %v1083 = vunpack.c.l.b16 %v458
  %v1084 = vunpack.c.h.b16 %v458
  %v1085 = vunpack.c.l.b16 %v459
  %v1086 = vunpack.c.h.b16 %v459
  %v1087 = vunpack.c.l.b16 %v460
  %v1088 = vunpack.c.h.b16 %v460
  %v1089 = vunpack.c.l.b16 %v461
  %v1090 = vunpack.c.h.b16 %v461
  %v1091 = vunpack.c.l.b16 %v462
  %v1092 = vunpack.c.h.b16 %v462
  %v1093 = vunpack.c.l.b16 %v463
  %v1094 = vunpack.c.h.b16 %v463
  %v1095 = vunpack.c.l.b16 %v464
  %v1096 = vunpack.c.h.b16 %v464
  %v1097 = vunpack.c.l.b16 %v465
  %v1098 = vunpack.c.h.b16 %v465
  %v1099 = vunpack.c.l.b16 %v466
  %v1100 = vunpack.c.h.b16 %v466
  %v1101 = vunpack.c.l.b16 %v467
  %v1102 = vunpack.c.h.b16 %v467
  %v1103 = vunpack.c.l.b16 %v468
  %v1104 = vunpack.c.h.b16 %v468
  %v1105 = vunpack.c.l.b16 %v469
  %v1106 = vunpack.c.h.b16 %v469
  %v1107 = vunpack.c.l.b16 %v470
  %v1108 = vunpack.c.h.b16 %v470
  %v1109 = vunpack.c.l.b16 %v471
  %v1110 = vunpack.c.h.b16 %v471
  %v1111 = vunpack.c.l.b16 %v472
  %v1112 = vunpack.c.h.b16 %v472
  %v1113 = vunpack.c.l.b16 %v473
  %v1114 = vunpack.c.h.b16 %v473
  %v1115 = vunpack.c.l.b16 %v474
  %v1116 = vunpack.c.h.b16 %v474
  %v1117 = vunpack.c.l.b16 %v475
  %v1118 = vunpack.c.h.b16 %v475
  %v1119 = vunpack.c.l.b16 %v476
  %v1120 = vunpack.c.h.b16 %v476
  %v1121 = vunpack.c.l.b16 %v477
  %v1122 = vunpack.c.h.b16 %v477
  %v1123 = vunpack.c.l.b16 %v478
  %v1124 = vunpack.c.h.b16 %v478
  %v1125 = vunpack.c.l.b16 %v479
  %v1126 = vunpack.c.h.b16 %v479
  %v1127 = vunpack.c.l.b16 %v480
  %v1128 = vunpack.c.h.b16 %v480
  %v1129 = vunpack.c.l.b16 %v481
  %v1130 = vunpack.c.h.b16 %v481
  %v1131 = vunpack.c.l.b16 %v482
  %v1132 = vunpack.c.h.b16 %v482
  %v1133 = vunpack.c.l.b16 %v483
  %v1134 = vunpack.c.h.b16 %v483
  %v1135 = vunpack.c.l.b16 %v484
  %v1136 = vunpack.c.h.b16 %v484
  %v1137 = vunpack.c.l.b16 %v485
  %v1138 = vunpack.c.h.b16 %v485
  %v1139 = vunpack.c.l.b16 %v486
  %v1140 = vunpack.c.h.b16 %v486
  %v1141 = vunpack.c.l.b16 %v487
  %v1142 = vunpack.c.h.b16 %v487
  %v1143 = vunpack.c.l.b16 %v488
  %v1144 = vunpack.c.h.b16 %v488
  %v1145 = vunpack.c.l.b16 %v489
  %v1146 = vunpack.c.h.b16 %v489
  %v1147 = vunpack.c.l.b16 %v490
  %v1148 = vunpack.c.h.b16 %v490
  %v1149 = vunpack.c.l.b16 %v491
  %v1150 = vunpack.c.h.b16 %v491
  %v1151 = vunpack.c.l.b16 %v492
  %v1152 = vunpack.c.h.b16 %v492
  %v1153 = vunpack.c.l.b16 %v493
  %v1154 = vunpack.c.h.b16 %v493
  %v1155 = vunpack.c.l.b16 %v494
  %v1156 = vunpack.c.h.b16 %v494
  %v1157 = vunpack.c.l.b16 %v495
  %v1158 = vunpack.c.h.b16 %v495
  %v1159 = vunpack.c.l.b16 %v496
  %v1160 = vunpack.c.h.b16 %v496
  %v1161 = vunpack.c.l.b16 %v497
  %v1162 = vunpack.c.h.b16 %v497
  %v1163 = vunpack.c.l.b16 %v498
  %v1164 = vunpack.c.h.b16 %v498
  %v1165 = vunpack.c.l.b16 %v499
  %v1166 = vunpack.c.h.b16 %v499
  %v1167 = vunpack.c.l.b16 %v500
  %v1168 = vunpack.c.h.b16 %v500
  %v1169 = vunpack.c.l.b16 %v501
  %v1170 = vunpack.c.h.b16 %v501
  %v1171 = vunpack.c.l.b16 %v502
  %v1172 = vunpack.c.h.b16 %v502
  %v1173 = vunpack.c.l.b16 %v503
  %v1174 = vunpack.c.h.b16 %v503
  %v1175 = vunpack.c.l.b16 %v504
  %v1176 = vunpack.c.h.b16 %v504
  %v1177 = vunpack.c.l.b16 %v505
  %v1178 = vunpack.c.h.b16 %v505
  %v1179 = vunpack.c.l.b16 %v506
  %v1180 = vunpack.c.h.b16 %v506
  %v1181 = vunpack.c.l.b16 %v507
  %v1182 = vunpack.c.h.b16 %v507
  %v1183 = vunpack.c.l.b16 %v508
  %v1184 = vunpack.c.h.b16 %v508
  %v1185 = vunpack.c.l.b16 %v509
  %v1186 = vunpack.c.h.b16 %v509
  %v1187 = vunpack.c.l.b16 %v510
  %v1188 = vunpack.c.h.b16 %v510
  %v1189 = vunpack.c.l.b16 %v511
  %v1190 = vunpack.c.h.b16 %v511
  %v1191 = vunpack.c.l.b16 %v512
  %v1192 = vunpack.c.h.b16 %v512
  %v1193 = vunpack.c.l.b16 %v513
  %v1194 = vunpack.c.h.b16 %v513
  %v1195 = vunpack.c.l.b16 %v514
  %v1196 = vunpack.c.h.b16 %v514
  %v1197 = vunpack.c.l.b16 %v515
  %v1198 = vunpack.c.h.b16 %v515
  %v1199 = vunpack.c.l.b16 %v516
  %v1200 = vunpack.c.h.b16 %v516
  %v1201 = vunpack.c.l.b16 %v517
  %v1202 = vunpack.c.h.b16 %v517
  %v1203 = vunpack.c.l.b16 %v518
  %v1204 = vunpack.c.h.b16 %v518
  %v1205 = vunpack.c.l.b16 %v519
  %v1206 = vunpack.c.h.b16 %v519
  %v1207 = vunpack.c.l.b16 %v520
  %v1208 = vunpack.c.h.b16 %v520
  %v1209 = vunpack.c.l.b16 %v521
  %v1210 = vunpack.c.h.b16 %v521
  %v1211 = vunpack.c.l.b16 %v522
  %v1212 = vunpack.c.h.b16 %v522
  %v1213 = vunpack.c.l.b16 %v523
  %v1214 = vunpack.c.h.b16 %v523
  %v1215 = vunpack.c.l.b16 %v524
  %v1216 = vunpack.c.h.b16 %v524
  %v1217 = vunpack.c.l.b16 %v525
  %v1218 = vunpack.c.h.b16 %v525
  %v1219 = vunpack.c.l.b16 %v526
  %v1220 = vunpack.c.h.b16 %v526
  %v1221 = vunpack.c.l.b16 %v527
  %v1222 = vunpack.c.h.b16 %v527
  %v1223 = vunpack.c.l.b16 %v528
  %v1224 = vunpack.c.h.b16 %v528
  %v1225 = vunpack.c.l.b16 %v529
  %v1226 = vunpack.c.h.b16 %v529
  %v1227 = vunpack.c.l.b16 %v530
  %v1228 = vunpack.c.h.b16 %v530
  %v1229 = vunpack.c.l.b16 %v531
  %v1230 = vunpack.c.h.b16 %v531
  %v1231 = vunpack.c.l.b16 %v532
  %v1232 = vunpack.c.h.b16 %v532
  %v1233 = vunpack.c.l.b16 %v533
  %v1234 = vunpack.c.h.b16 %v533
  %v1235 = vunpack.c.l.b16 %v534
  %v1236 = vunpack.c.h.b16 %v534
  %v1237 = vunpack.c.l.b16 %v535
  %v1238 = vunpack.c.h.b16 %v535
  %v1239 = vunpack.c.l.b16 %v536
  %v1240 = vunpack.c.h.b16 %v536
  %v1241 = vunpack.c.l.b16 %v537
  %v1242 = vunpack.c.h.b16 %v537
  %v1243 = vunpack.c.l.b16 %v538
  %v1244 = vunpack.c.h.b16 %v538
  %v1245 = vunpack.c.l.b16 %v539
  %v1246 = vunpack.c.h.b16 %v539
  %v1247 = vunpack.c.l.b16 %v540
  %v1248 = vunpack.c.h.b16 %v540
  %v1249 = vunpack.c.l.b16 %v541
  %v1250 = vunpack.c.h.b16 %v541
  %v1251 = vunpack.c.l.b16 %v542
  %v1252 = vunpack.c.h.b16 %v542
  %v1253 = vunpack.c.l.b16 %v543
  %v1254 = vunpack.c.h.b16 %v543
  %v1255 = vunpack.c.l.b16 %v544
  %v1256 = vunpack.c.h.b16 %v544
  %v1257 = vunpack.c.l.b16 %v545
  %v1258 = vunpack.c.h.b16 %v545
  %v1259 = vunpack.c.l.b16 %v546
  %v1260 = vunpack.c.h.b16 %v546
  %v1261 = vunpack.c.l.b16 %v547
  %v1262 = vunpack.c.h.b16 %v547
  %v1263 = vunpack.c.l.b16 %v548
  %v1264 = vunpack.c.h.b16 %v548
  %v1265 = vunpack.c.l.b16 %v549
  %v1266 = vunpack.c.h.b16 %v549
  %v1267 = vunpack.c.l.b16 %v550
  %v1268 = vunpack.c.h.b16 %v550
  %v1269 = vunpack.c.l.b16 %v551
  %v1270 = vunpack.c.h.b16 %v551
  %v1271 = vunpack.c.l.b16 %v552
  %v1272 = vunpack.c.h.b16 %v552
  %v1273 = vunpack.c.l.b16 %v553
  %v1274 = vunpack.c.h.b16 %v553
  %v1275 = vunpack.c.l.b16 %v554
  %v1276 = vunpack.c.h.b16 %v554
  %v1277 = vunpack.c.l.b16 %v555
  %v1278 = vunpack.c.h.b16 %v555
  %v1279 = vunpack.c.l.b16 %v556
  %v1280 = vunpack.c.h.b16 %v556
  %v1281 = vunpack.c.l.b16 %v557
  %v1282 = vunpack.c.h.b16 %v557
  %v1283 = vunpack.c.l.b16 %v558
  %v1284 = vunpack.c.h.b16 %v558
  %v1285 = vunpack.c.l.b16 %v559
  %v1286 = vunpack.c.h.b16 %v559
  %v1287 = vunpack.c.l.b16 %v560
  %v1288 = vunpack.c.h.b16 %v560
  %v1289 = vunpack.c.l.b16 %v561
  %v1290 = vunpack.c.h.b16 %v561
  %v1291 = vunpack.c.l.b16 %v562
  %v1292 = vunpack.c.h.b16 %v562
  %v1293 = vunpack.c.l.b16 %v563
  %v1294 = vunpack.c.h.b16 %v563
  %v1295 = vunpack.c.l.b16 %v564
  %v1296 = vunpack.c.h.b16 %v564
  %v1297 = vunpack.c.l.b16 %v565
  %v1298 = vunpack.c.h.b16 %v565
  %v1299 = vunpack.c.l.b16 %v566
  %v1300 = vunpack.c.h.b16 %v566
  %v1301 = vunpack.c.l.b16 %v567
  %v1302 = vunpack.c.h.b16 %v567
  %v1303 = vunpack.c.l.b16 %v568
  %v1304 = vunpack.c.h.b16 %v568
  %v1305 = vunpack.c.l.b16 %v569
  %v1306 = vunpack.c.h.b16 %v569
  %v1307 = vunpack.c.l.b16 %v570
  %v1308 = vunpack.c.h.b16 %v570
  %v1309 = vunpack.c.l.b16 %v571
  %v1310 = vunpack.c.h.b16 %v571
  %v1311 = vunpack.c.l.b16 %v572
  %v1312 = vunpack.c.h.b16 %v572
  %v1313 = vunpack.c.l.b16 %v573
  %v1314 = vunpack.c.h.b16 %v573
  %v1315 = vunpack.c.l.b16 %v574
  %v1316 = vunpack.c.h.b16 %v574
  %v1317 = vunpack.c.l.b16 %v575
  %v1318 = vunpack.c.h.b16 %v575
  %v1319 = vunpack.c.l.b16 %v576
  %v1320 = vunpack.c.h.b16 %v576
  %v1321 = vunpack.c.l.b16 %v577
  %v1322 = vunpack.c.h.b16 %v577
  %v1323 = vunpack.c.l.b16 %v578
  %v1324 = vunpack.c.h.b16 %v578
  %v1325 = vunpack.c.l.b16 %v579
  %v1326 = vunpack.c.h.b16 %v579
  %v1327 = vunpack.c.l.b16 %v580
  %v1328 = vunpack.c.h.b16 %v580
  %v1329 = vunpack.c.l.b16 %v581
  %v1330 = vunpack.c.h.b16 %v581
  %v1331 = vunpack.c.l.b16 %v582
  %v1332 = vunpack.c.h.b16 %v582
  %v1333 = vunpack.c.l.b16 %v583
  %v1334 = vunpack.c.h.b16 %v583
  %v1335 = vunpack.c.l.b16 %v584
  %v1336 = vunpack.c.h.b16 %v584
  %v1337 = vunpack.c.l.b16 %v585
  %v1338 = vunpack.c.h.b16 %v585
  %v1339 = vunpack.c.l.b16 %v586
  %v1340 = vunpack.c.h.b16 %v586
  %v1341 = vunpack.c.l.b16 %v587
  %v1342 = vunpack.c.h.b16 %v587
  %v1343 = vunpack.c.l.b16 %v588
  %v1344 = vunpack.c.h.b16 %v588
  %v1345 = vunpack.c.l.b16 %v589
  %v1346 = vunpack.c.h.b16 %v589
  %v1347 = vunpack.c.l.b16 %v590
  %v1348 = vunpack.c.h.b16 %v590
  %v1349 = vunpack.c.l.b16 %v591
  %v1350 = vunpack.c.h.b16 %v591
  %v1351 = vunpack.c.l.b16 %v592
  %v1352 = vunpack.c.h.b16 %v592
  %v1353 = vunpack.c.l.b16 %v593
  %v1354 = vunpack.c.h.b16 %v593
  %v1355 = vunpack.c.l.b16 %v594
  %v1356 = vunpack.c.h.b16 %v594
  %v1357 = vunpack.c.l.b16 %v595
  %v1358 = vunpack.c.h.b16 %v595
  %v1359 = vunpack.c.l.b16 %v596
  %v1360 = vunpack.c.h.b16 %v596
  %v1361 = vunpack.c.l.b16 %v597
  %v1362 = vunpack.c.h.b16 %v597
  %v1363 = vunpack.c.l.b16 %v598
  %v1364 = vunpack.c.h.b16 %v598
  %v1365 = vunpack.c.l.b16 %v599
  %v1366 = vunpack.c.h.b16 %v599
  %v1367 = vunpack.c.l.b16 %v600
  %v1368 = vunpack.c.h.b16 %v600
  %v1369 = vunpack.c.l.b16 %v601
  %v1370 = vunpack.c.h.b16 %v601
  %v1371 = vunpack.c.l.b16 %v602
  %v1372 = vunpack.c.h.b16 %v602
  %v1373 = vunpack.c.l.b16 %v603
  %v1374 = vunpack.c.h.b16 %v603
  %v1375 = vunpack.c.l.b16 %v604
  %v1376 = vunpack.c.h.b16 %v604
  %v1377 = vunpack.c.l.b16 %v605
  %v1378 = vunpack.c.h.b16 %v605
  %v1379 = vunpack.c.l.b16 %v606
  %v1380 = vunpack.c.h.b16 %v606
  %v1381 = vunpack.c.l.b16 %v607
  %v1382 = vunpack.c.h.b16 %v607
  %v1383 = vunpack.c.l.b16 %v608
  %v1384 = vunpack.c.h.b16 %v608
  %v1385 = vunpack.c.l.b16 %v609
  %v1386 = vunpack.c.h.b16 %v609
  %v1387 = vunpack.c.l.b16 %v610
  %v1388 = vunpack.c.h.b16 %v610
  %v1389 = vunpack.c.l.b16 %v611
  %v1390 = vunpack.c.h.b16 %v611
  %v1391 = vunpack.c.l.b16 %v612
  %v1392 = vunpack.c.h.b16 %v612
  %v1393 = vunpack.c.l.b16 %v613
  %v1394 = vunpack.c.h.b16 %v613
  %v1395 = vunpack.c.l.b16 %v614
  %v1396 = vunpack.c.h.b16 %v614
  %v1397 = vunpack.c.l.b16 %v615
  %v1398 = vunpack.c.h.b16 %v615
  %v1399 = vunpack.c.l.b16 %v616
  %v1400 = vunpack.c.h.b16 %v616
  %v1401 = vunpack.c.l.b16 %v617
  %v1402 = vunpack.c.h.b16 %v617
  %v1403 = vunpack.c.l.b16 %v618
  %v1404 = vunpack.c.h.b16 %v618
  %v1405 = vunpack.c.l.b16 %v619
  %v1406 = vunpack.c.h.b16 %v619
  %v1407 = vunpack.c.l.b16 %v620
  %v1408 = vunpack.c.h.b16 %v620
  %v1409 = vunpack.c.l.b16 %v621
  %v1410 = vunpack.c.h.b16 %v621
  %v1411 = vunpack.c.l.b16 %v622
  %v1412 = vunpack.c.h.b16 %v622
  %v1413 = vunpack.c.l.b16 %v623
  %v1414 = vunpack.c.h.b16 %v623
  %v1415 = vunpack.c.l.b16 %v624
  %v1416 = vunpack.c.h.b16 %v624
  %v1417 = vunpack.c.l.b16 %v625
  %v1418 = vunpack.c.h.b16 %v625
  %v1419 = vunpack.c.l.b16 %v626
  %v1420 = vunpack.c.h.b16 %v626
  %v1421 = vunpack.c.l.b16 %v627
  %v1422 = vunpack.c.h.b16 %v627
  %v1423 = vunpack.c.l.b16 %v628
  %v1424 = vunpack.c.h.b16 %v628
  %v1425 = vunpack.c.l.b16 %v629
  %v1426 = vunpack.c.h.b16 %v629
  %v1427 = vunpack.c.l.b16 %v630
  %v1428 = vunpack.c.h.b16 %v630
  %v1429 = vunpack.c.l.b16 %v631
  %v1430 = vunpack.c.h.b16 %v631
  %v1431 = vunpack.c.l.b16 %v632
  %v1432 = vunpack.c.h.b16 %v632
  %v1433 = vunpack.c.l.b16 %v633
  %v1434 = vunpack.c.h.b16 %v633
  %v1435 = vunpack.c.l.b16 %v634
  %v1436 = vunpack.c.h.b16 %v634
  %v1437 = vunpack.c.l.b16 %v635
  %v1438 = vunpack.c.h.b16 %v635
  %v1439 = vunpack.c.l.b16 %v636
  %v1440 = vunpack.c.h.b16 %v636
  %v1441 = vunpack.c.l.b16 %v637
  %v1442 = vunpack.c.h.b16 %v637
  %v1443 = vunpack.c.l.b16 %v638
  %v1444 = vunpack.c.h.b16 %v638
  %v1445 = vunpack.c.l.b16 %v639
  %v1446 = vunpack.c.h.b16 %v639
  %v1447 = vunpack.c.l.b16 %v640
  %v1448 = vunpack.c.h.b16 %v640
  %v1449 = vunpack.c.l.b16 %v641
  %v1450 = vunpack.c.h.b16 %v641
  %v1451 = vunpack.c.l.b16 %v642
  %v1452 = vunpack.c.h.b16 %v642
  %v1453 = vunpack.c.l.b16 %v643
  %v1454 = vunpack.c.h.b16 %v643
  %v1455 = vunpack.c.l.b16 %v644
  %v1456 = vunpack.c.h.b16 %v644
  %v1457 = vunpack.c.l.b16 %v645
  %v1458 = vunpack.c.h.b16 %v645
  %v1459 = vunpack.c.l.b16 %v646
  %v1460 = vunpack.c.h.b16 %v646
  %v1461 = vunpack.c.l.b16 %v647
  %v1462 = vunpack.c.h.b16 %v647
  %v1463 = vunpack.c.l.b16 %v648
  %v1464 = vunpack.c.h.b16 %v648
  %v1465 = vunpack.c.l.b16 %v649
  %v1466 = vunpack.c.h.b16 %v649
  %v1467 = vunpack.c.l.b16 %v650
  %v1468 = vunpack.c.h.b16 %v650
  %v1469 = vunpack.c.l.b16 %v651
  %v1470 = vunpack.c.h.b16 %v651
  %v1471 = vunpack.c.l.b16 %v652
  %v1472 = vunpack.c.h.b16 %v652
  %v1473 = vunpack.c.l.b16 %v653
  %v1474 = vunpack.c.h.b16 %v653
  %v1475 = vunpack.c.l.b16 %v654
  %v1476 = vunpack.c.h.b16 %v654
  %v1477 = vunpack.c.l.b16 %v655
  %v1478 = vunpack.c.h.b16 %v655
  %v1479 = vunpack.c.l.b16 %v656
  %v1480 = vunpack.c.h.b16 %v656
  %v1481 = vunpack.c.l.b16 %v657
  %v1482 = vunpack.c.h.b16 %v657
  %v1483 = vpack.c.b16 %v987, %v971
  %v1484 = vpack.c.b16 %v988, %v972
  %v1485 = vpack.c.b16 %v989, %v973
  %v1486 = vpack.c.b16 %v990, %v974
  %v1487 = vpack.c.b16 %v991, %v975
  %v1488 = vpack.c.b16 %v992, %v976
  %v1489 = vpack.c.b16 %v993, %v977
  %v1490 = vpack.c.b16 %v994, %v978
  %v1491 = vpack.c.b16 %v995, %v979
  %v1492 = vpack.c.b16 %v996, %v980
  %v1493 = vpack.c.b16 %v997, %v981
  %v1494 = vpack.c.b16 %v998, %v982
  %v1495 = vpack.c.b16 %v999, %v983
  %v1496 = vpack.c.b16 %v1000, %v984
  %v1497 = vpack.c.b16 %v1001, %v985
  %v1498 = vpack.c.b16 %v1002, %v986
  %v1499 = vpack.c.b16 %v1019, %v1003
  %v1500 = vpack.c.b16 %v1020, %v1004
  %v1501 = vpack.c.b16 %v1021, %v1005
  %v1502 = vpack.c.b16 %v1022, %v1006
  %v1503 = vpack.c.b16 %v1023, %v1007
  %v1504 = vpack.c.b16 %v1024, %v1008
  %v1505 = vpack.c.b16 %v1025, %v1009
  %v1506 = vpack.c.b16 %v1026, %v1010
  %v1507 = vpack.c.b16 %v1027, %v1011
  %v1508 = vpack.c.b16 %v1028, %v1012
  %v1509 = vpack.c.b16 %v1029, %v1013
  %v1510 = vpack.c.b16 %v1030, %v1014
  %v1511 = vpack.c.b16 %v1031, %v1015
  %v1512 = vpack.c.b16 %v1032, %v1016
  %v1513 = vpack.c.b16 %v1033, %v1017
  %v1514 = vpack.c.b16 %v1034, %v1018
  %v1515 = vpack.c.b16 %v1051, %v1035
  %v1516 = vpack.c.b16 %v1052, %v1036
  %v1517 = vpack.c.b16 %v1053, %v1037
  %v1518 = vpack.c.b16 %v1054, %v1038
  %v1519 = vpack.c.b16 %v1055, %v1039
  %v1520 = vpack.c.b16 %v1056, %v1040
  %v1521 = vpack.c.b16 %v1057, %v1041
  %v1522 = vpack.c.b16 %v1058, %v1042
  %v1523 = vpack.c.b16 %v1059, %v1043
  %v1524 = vpack.c.b16 %v1060, %v1044
  %v1525 = vpack.c.b16 %v1061, %v1045
  %v1526 = vpack.c.b16 %v1062, %v1046
  %v1527 = vpack.c.b16 %v1063, %v1047
  %v1528 = vpack.c.b16 %v1064, %v1048
  %v1529 = vpack.c.b16 %v1065, %v1049
  %v1530 = vpack.c.b16 %v1066, %v1050
  %v1531 = vpack.c.b16 %v1083, %v1067
  %v1532 = vpack.c.b16 %v1084, %v1068
  %v1533 = vpack.c.b16 %v1085, %v1069
  %v1534 = vpack.c.b16 %v1086, %v1070
  %v1535 = vpack.c.b16 %v1087, %v1071
  %v1536 = vpack.c.b16 %v1088, %v1072
  %v1537 = vpack.c.b16 %v1089, %v1073
  %v1538 = vpack.c.b16 %v1090, %v1074
  %v1539 = vpack.c.b16 %v1091, %v1075
  %v1540 = vpack.c.b16 %v1092, %v1076
  %v1541 = vpack.c.b16 %v1093, %v1077
  %v1542 = vpack.c.b16 %v1094, %v1078
  %v1543 = vpack.c.b16 %v1095, %v1079
  %v1544 = vpack.c.b16 %v1096, %v1080
  %v1545 = vpack.c.b16 %v1097, %v1081
  %v1546 = vpack.c.b16 %v1098, %v1082
  %v1547 = vpack.c.b16 %v1115, %v1099
  %v1548 = vpack.c.b16 %v1116, %v1100
  %v1549 = vpack.c.b16 %v1117, %v1101
  %v1550 = vpack.c.b16 %v1118, %v1102
  %v1551 = vpack.c.b16 %v1119, %v1103
  %v1552 = vpack.c.b16 %v1120, %v1104
  %v1553 = vpack.c.b16 %v1121, %v1105
  %v1554 = vpack.c.b16 %v1122, %v1106
  %v1555 = vpack.c.b16 %v1123, %v1107
  %v1556 = vpack.c.b16 %v1124, %v1108
  %v1557 = vpack.c.b16 %v1125, %v1109
  %v1558 = vpack.c.b16 %v1126, %v1110
  %v1559 = vpack.c.b16 %v1127, %v1111
  %v1560 = vpack.c.b16 %v1128, %v1112
  %v1561 = vpack.c.b16 %v1129, %v1113
  %v1562 = vpack.c.b16 %v1130, %v1114
  %v1563 = vpack.c.b16 %v1147, %v1131
  %v1564 = vpack.c.b16 %v1148, %v1132
  %v1565 = vpack.c.b16 %v1149, %v1133
  %v1566 = vpack.c.b16 %v1150, %v1134
  %v1567 = vpack.c.b16 %v1151, %v1135
  %v1568 = vpack.c.b16 %v1152, %v1136
  %v1569 = vpack.c.b16 %v1153, %v1137
  %v1570 = vpack.c.b16 %v1154, %v1138
  %v1571 = vpack.c.b16 %v1155, %v1139
  %v1572 = vpack.c.b16 %v1156, %v1140
  %v1573 = vpack.c.b16 %v1157, %v1141
  %v1574 = vpack.c.b16 %v1158, %v1142
  %v1575 = vpack.c.b16 %v1159, %v1143
  %v1576 = vpack.c.b16 %v1160, %v1144
  %v1577 = vpack.c.b16 %v1161, %v1145
  %v1578 = vpack.c.b16 %v1162, %v1146
  %v1579 = vpack.c.b16 %v1179, %v1163
  %v1580 = vpack.c.b16 %v1180, %v1164
  %v1581 = vpack.c.b16 %v1181, %v1165
  %v1582 = vpack.c.b16 %v1182, %v1166
  %v1583 = vpack.c.b16 %v1183, %v1167
  %v1584 = vpack.c.b16 %v1184, %v1168
  %v1585 = vpack.c.b16 %v1185, %v1169
  %v1586 = vpack.c.b16 %v1186, %v1170
  %v1587 = vpack.c.b16 %v1187, %v1171
  %v1588 = vpack.c.b16 %v1188, %v1172
  %v1589 = vpack.c.b16 %v1189, %v1173
  %v1590 = vpack.c.b16 %v1190, %v1174
  %v1591 = vpack.c.b16 %v1191, %v1175
  %v1592 = vpack.c.b16 %v1192, %v1176
  %v1593 = vpack.c.b16 %v1193, %v1177
  %v1594 = vpack.c.b16 %v1194, %v1178
  %v1595 = vpack.c.b16 %v1211, %v1195
  %v1596 = vpack.c.b16 %v1212, %v1196
  %v1597 = vpack.c.b16 %v1213, %v1197
  %v1598 = vpack.c.b16 %v1214, %v1198
  %v1599 = vpack.c.b16 %v1215, %v1199
  %v1600 = vpack.c.b16 %v1216, %v1200
  %v1601 = vpack.c.b16 %v1217, %v1201
  %v1602 = vpack.c.b16 %v1218, %v1202
  %v1603 = vpack.c.b16 %v1219, %v1203
  %v1604 = vpack.c.b16 %v1220, %v1204
  %v1605 = vpack.c.b16 %v1221, %v1205
  %v1606 = vpack.c.b16 %v1222, %v1206
  %v1607 = vpack.c.b16 %v1223, %v1207
  %v1608 = vpack.c.b16 %v1224, %v1208
  %v1609 = vpack.c.b16 %v1225, %v1209
  %v1610 = vpack.c.b16 %v1226, %v1210
  %v1611 = vpack.c.b16 %v1243, %v1227
  %v1612 = vpack.c.b16 %v1244, %v1228
  %v1613 = vpack.c.b16 %v1245, %v1229
  %v1614 = vpack.c.b16 %v1246, %v1230
  %v1615 = vpack.c.b16 %v1247, %v1231
  %v1616 = vpack.c.b16 %v1248, %v1232
  %v1617 = vpack.c.b16 %v1249, %v1233
  %v1618 = vpack.c.b16 %v1250, %v1234
  %v1619 = vpack.c.b16 %v1251, %v1235
  %v1620 = vpack.c.b16 %v1252, %v1236
  %v1621 = vpack.c.b16 %v1253, %v1237
  %v1622 = vpack.c.b16 %v1254, %v1238
  %v1623 = vpack.c.b16 %v1255, %v1239
  %v1624 = vpack.c.b16 %v1256, %v1240
  %v1625 = vpack.c.b16 %v1257, %v1241
  %v1626 = vpack.c.b16 %v1258, %v1242
  %v1627 = vpack.c.b16 %v1275, %v1259
  %v1628 = vpack.c.b16 %v1276, %v1260
  %v1629 = vpack.c.b16 %v1277, %v1261
  %v1630 = vpack.c.b16 %v1278, %v1262
  %v1631 = vpack.c.b16 %v1279, %v1263
  %v1632 = vpack.c.b16 %v1280, %v1264
  %v1633 = vpack.c.b16 %v1281, %v1265
  %v1634 = vpack.c.b16 %v1282, %v1266
  %v1635 = vpack.c.b16 %v1283, %v1267
  %v1636 = vpack.c.b16 %v1284, %v1268
  %v1637 = vpack.c.b16 %v1285, %v1269
  %v1638 = vpack.c.b16 %v1286, %v1270
  %v1639 = vpack.c.b16 %v1287, %v1271
  %v1640 = vpack.c.b16 %v1288, %v1272
  %v1641 = vpack.c.b16 %v1289, %v1273
  %v1642 = vpack.c.b16 %v1290, %v1274
  %v1643 = vpack.c.b16 %v1307, %v1291
  %v1644 = vpack.c.b16 %v1308, %v1292
  %v1645 = vpack.c.b16 %v1309, %v1293
  %v1646 = vpack.c.b16 %v1310, %v1294
  %v1647 = vpack.c.b16 %v1311, %v1295
  %v1648 = vpack.c.b16 %v1312, %v1296
  %v1649 = vpack.c.b16 %v1313, %v1297
  %v1650 = vpack.c.b16 %v1314, %v1298
  %v1651 = vpack.c.b16 %v1315, %v1299
  %v1652 = vpack.c.b16 %v1316, %v1300
  %v1653 = vpack.c.b16 %v1317, %v1301
  %v1654 = vpack.c.b16 %v1318, %v1302
  %v1655 = vpack.c.b16 %v1319, %v1303
  %v1656 = vpack.c.b16 %v1320, %v1304
  %v1657 = vpack.c.b16 %v1321, %v1305
  %v1658 = vpack.c.b16 %v1322, %v1306
  %v1659 = vpack.c.b16 %v1339, %v1323
  %v1660 = vpack.c.b16 %v1340, %v1324
  %v1661 = vpack.c.b16 %v1341, %v1325
  %v1662 = vpack.c.b16 %v1342, %v1326
  %v1663 = vpack.c.b16 %v1343, %v1327
  %v1664 = vpack.c.b16 %v1344, %v1328
  %v1665 = vpack.c.b16 %v1345, %v1329
  %v1666 = vpack.c.b16 %v1346, %v1330
  %v1667 = vpack.c.b16 %v1347, %v1331
  %v1668 = vpack.c.b16 %v1348, %v1332
  %v1669 = vpack.c.b16 %v1349, %v1333
  %v1670 = vpack.c.b16 %v1350, %v1334
  %v1671 = vpack.c.b16 %v1351, %v1335
  %v1672 = vpack.c.b16 %v1352, %v1336
  %v1673 = vpack.c.b16 %v1353, %v1337
  %v1674 = vpack.c.b16 %v1354, %v1338
  %v1675 = vpack.c.b16 %v1371, %v1355
  %v1676 = vpack.c.b16 %v1372, %v1356
  %v1677 = vpack.c.b16 %v1373, %v1357
  %v1678 = vpack.c.b16 %v1374, %v1358
  %v1679 = vpack.c.b16 %v1375, %v1359
  %v1680 = vpack.c.b16 %v1376, %v1360
  %v1681 = vpack.c.b16 %v1377, %v1361
  %v1682 = vpack.c.b16 %v1378, %v1362
  %v1683 = vpack.c.b16 %v1379, %v1363
  %v1684 = vpack.c.b16 %v1380, %v1364
  %v1685 = vpack.c.b16 %v1381, %v1365
  %v1686 = vpack.c.b16 %v1382, %v1366
  %v1687 = vpack.c.b16 %v1383, %v1367
  %v1688 = vpack.c.b16 %v1384, %v1368
  %v1689 = vpack.c.b16 %v1385, %v1369
  %v1690 = vpack.c.b16 %v1386, %v1370
  %v1691 = vpack.c.b16 %v1403, %v1387
  %v1692 = vpack.c.b16 %v1404, %v1388
  %v1693 = vpack.c.b16 %v1405, %v1389
  %v1694 = vpack.c.b16 %v1406, %v1390
  %v1695 = vpack.c.b16 %v1407, %v1391
  %v1696 = vpack.c.b16 %v1408, %v1392
  %v1697 = vpack.c.b16 %v1409, %v1393
  %v1698 = vpack.c.b16 %v1410, %v1394
  %v1699 = vpack.c.b16 %v1411, %v1395
  %v1700 = vpack.c.b16 %v1412, %v1396
  %v1701 = vpack.c.b16 %v1413, %v1397
  %v1702 = vpack.c.b16 %v1414, %v1398
  %v1703 = vpack.c.b16 %v1415, %v1399
  %v1704 = vpack.c.b16 %v1416, %v1400
  %v1705 = vpack.c.b16 %v1417, %v1401
  %v1706 = vpack.c.b16 %v1418, %v1402
  %v1707 = vpack.c.b16 %v1435, %v1419
  %v1708 = vpack.c.b16 %v1436, %v1420
  %v1709 = vpack.c.b16 %v1437, %v1421
  %v1710 = vpack.c.b16 %v1438, %v1422
  %v1711 = vpack.c.b16 %v1439, %v1423
  %v1712 = vpack.c.b16 %v1440, %v1424
  %v1713 = vpack.c.b16 %v1441, %v1425
  %v1714 = vpack.c.b16 %v1442, %v1426
  %v1715 = vpack.c.b16 %v1443, %v1427
  %v1716 = vpack.c.b16 %v1444, %v1428
  %v1717 = vpack.c.b16 %v1445, %v1429
  %v1718 = vpack.c.b16 %v1446, %v1430
  %v1719 = vpack.c.b16 %v1447, %v1431
  %v1720 = vpack.c.b16 %v1448, %v1432
  %v1721 = vpack.c.b16 %v1449, %v1433
  %v1722 = vpack.c.b16 %v1450, %v1434
  %v1723 = vpack.c.b16 %v1467, %v1451
  %v1724 = vpack.c.b16 %v1468, %v1452
  %v1725 = vpack.c.b16 %v1469, %v1453
  %v1726 = vpack.c.b16 %v1470, %v1454
  %v1727 = vpack.c.b16 %v1471, %v1455
  %v1728 = vpack.c.b16 %v1472, %v1456
  %v1729 = vpack.c.b16 %v1473, %v1457
  %v1730 = vpack.c.b16 %v1474, %v1458
  %v1731 = vpack.c.b16 %v1475, %v1459
  %v1732 = vpack.c.b16 %v1476, %v1460
  %v1733 = vpack.c.b16 %v1477, %v1461
  %v1734 = vpack.c.b16 %v1478, %v1462
  %v1735 = vpack.c.b16 %v1479, %v1463
  %v1736 = vpack.c.b16 %v1480, %v1464
  %v1737 = vpack.c.b16 %v1481, %v1465
  %v1738 = vpack.c.b16 %v1482, %v1466
  %1995 = vmatpush.bf16.msra.mxu0 %v1595
  %1996 = vmatpush.bf16.msra.mxu0 %v1579
  %1997 = vmatpush.bf16.msra.mxu0 %v1563
  %1998 = vmatpush.bf16.msra.mxu0 %v1547
  %1999 = vmatpush.bf16.msra.mxu0 %v1531
  %2000 = vmatpush.bf16.msra.mxu0 %v1515
  %2001 = vmatpush.bf16.msra.mxu0 %v1499
  %2002 = vmatpush.bf16.msra.mxu0 %v1483
  %2003 = vmatmul.bf16.gmra.mxu0 %v711
  %v2004 = vpop.f32.mrf.mxu0
  %v2005 = vadd.f32 0.0, %v2004
  %v2006 = vpop.f32.mrf.mxu0
  %2007 = vdwg.mxu0
  %2008 = vmatpush.bf16.msra.mxu0 %v1723
  %2009 = vmatpush.bf16.msra.mxu0 %v1707
  %2010 = vmatpush.bf16.msra.mxu0 %v1691
  %2011 = vmatpush.bf16.msra.mxu0 %v1675
  %2012 = vmatpush.bf16.msra.mxu0 %v1659
  %2013 = vmatpush.bf16.msra.mxu0 %v1643
  %2014 = vmatpush.bf16.msra.mxu0 %v1627
  %2015 = vmatpush.bf16.msra.mxu0 %v1611
  %2016 = vmatmul.bf16.gmra.mxu0 %v712
  %v2017 = vpop.f32.mrf.mxu0
  %v2018 = vadd.f32 %v2005, %v2017
  %v2019 = vpop.f32.mrf.mxu0
  %2020 = vdwg.mxu0
  %2021 = vmatpush.bf16.msra.mxu0 %v1596
  %2022 = vmatpush.bf16.msra.mxu0 %v1580
  %2023 = vmatpush.bf16.msra.mxu0 %v1564
  %2024 = vmatpush.bf16.msra.mxu0 %v1548
  %2025 = vmatpush.bf16.msra.mxu0 %v1532
  %2026 = vmatpush.bf16.msra.mxu0 %v1516
  %2027 = vmatpush.bf16.msra.mxu0 %v1500
  %2028 = vmatpush.bf16.msra.mxu0 %v1484
  %2029 = vmatmul.bf16.gmra.mxu0 %v711
  %v2030 = vpop.f32.mrf.mxu0
  %v2031 = vadd.f32 0.0, %v2030
  %v2032 = vpop.f32.mrf.mxu0
  %2033 = vdwg.mxu0
  %2034 = vmatpush.bf16.msra.mxu0 %v1724
  %2035 = vmatpush.bf16.msra.mxu0 %v1708
  %2036 = vmatpush.bf16.msra.mxu0 %v1692
  %2037 = vmatpush.bf16.msra.mxu0 %v1676
  %2038 = vmatpush.bf16.msra.mxu0 %v1660
  %2039 = vmatpush.bf16.msra.mxu0 %v1644
  %2040 = vmatpush.bf16.msra.mxu0 %v1628
  %2041 = vmatpush.bf16.msra.mxu0 %v1612
  %2042 = vmatmul.bf16.gmra.mxu0 %v712
  %v2043 = vpop.f32.mrf.mxu0
  %v2044 = vadd.f32 %v2031, %v2043
  %v2045 = vpop.f32.mrf.mxu0
  %2046 = vdwg.mxu0
  %2047 = vmatpush.bf16.msra.mxu0 %v1597
  %2048 = vmatpush.bf16.msra.mxu0 %v1581
  %2049 = vmatpush.bf16.msra.mxu0 %v1565
  %2050 = vmatpush.bf16.msra.mxu0 %v1549
  %2051 = vmatpush.bf16.msra.mxu0 %v1533
  %2052 = vmatpush.bf16.msra.mxu0 %v1517
  %2053 = vmatpush.bf16.msra.mxu0 %v1501
  %2054 = vmatpush.bf16.msra.mxu0 %v1485
  %2055 = vmatmul.bf16.gmra.mxu0 %v711
  %v2056 = vpop.f32.mrf.mxu0
  %v2057 = vadd.f32 0.0, %v2056
  %v2058 = vpop.f32.mrf.mxu0
  %2059 = vdwg.mxu0
  %2060 = vmatpush.bf16.msra.mxu0 %v1725
  %2061 = vmatpush.bf16.msra.mxu0 %v1709
  %2062 = vmatpush.bf16.msra.mxu0 %v1693
  %2063 = vmatpush.bf16.msra.mxu0 %v1677
  %2064 = vmatpush.bf16.msra.mxu0 %v1661
  %2065 = vmatpush.bf16.msra.mxu0 %v1645
  %2066 = vmatpush.bf16.msra.mxu0 %v1629
  %2067 = vmatpush.bf16.msra.mxu0 %v1613
  %2068 = vmatmul.bf16.gmra.mxu0 %v712
  %v2069 = vpop.f32.mrf.mxu0
  %v2070 = vadd.f32 %v2057, %v2069
  %v2071 = vpop.f32.mrf.mxu0
  %2072 = vdwg.mxu0
  %2073 = vmatpush.bf16.msra.mxu0 %v1598
  %2074 = vmatpush.bf16.msra.mxu0 %v1582
  %2075 = vmatpush.bf16.msra.mxu0 %v1566
  %2076 = vmatpush.bf16.msra.mxu0 %v1550
  %2077 = vmatpush.bf16.msra.mxu0 %v1534
  %2078 = vmatpush.bf16.msra.mxu0 %v1518
  %2079 = vmatpush.bf16.msra.mxu0 %v1502
  %2080 = vmatpush.bf16.msra.mxu0 %v1486
  %2081 = vmatmul.bf16.gmra.mxu0 %v711
  %v2082 = vpop.f32.mrf.mxu0
  %v2083 = vadd.f32 0.0, %v2082
  %v2084 = vpop.f32.mrf.mxu0
  %2085 = vdwg.mxu0
  %2086 = vmatpush.bf16.msra.mxu0 %v1726
  %2087 = vmatpush.bf16.msra.mxu0 %v1710
  %2088 = vmatpush.bf16.msra.mxu0 %v1694
  %2089 = vmatpush.bf16.msra.mxu0 %v1678
  %2090 = vmatpush.bf16.msra.mxu0 %v1662
  %2091 = vmatpush.bf16.msra.mxu0 %v1646
  %2092 = vmatpush.bf16.msra.mxu0 %v1630
  %2093 = vmatpush.bf16.msra.mxu0 %v1614
  %2094 = vmatmul.bf16.gmra.mxu0 %v712
  %v2095 = vpop.f32.mrf.mxu0
  %v2096 = vadd.f32 %v2083, %v2095
  %v2097 = vpop.f32.mrf.mxu0
  %2098 = vdwg.mxu0
  %2099 = vmatpush.bf16.msra.mxu0 %v1599
  %2100 = vmatpush.bf16.msra.mxu0 %v1583
  %2101 = vmatpush.bf16.msra.mxu0 %v1567
  %2102 = vmatpush.bf16.msra.mxu0 %v1551
  %2103 = vmatpush.bf16.msra.mxu0 %v1535
  %2104 = vmatpush.bf16.msra.mxu0 %v1519
  %2105 = vmatpush.bf16.msra.mxu0 %v1503
  %2106 = vmatpush.bf16.msra.mxu0 %v1487
  %2107 = vmatmul.bf16.gmra.mxu0 %v711
  %v2108 = vpop.f32.mrf.mxu0
  %v2109 = vadd.f32 0.0, %v2108
  %v2110 = vpop.f32.mrf.mxu0
  %2111 = vdwg.mxu0
  %2112 = vmatpush.bf16.msra.mxu0 %v1727
  %2113 = vmatpush.bf16.msra.mxu0 %v1711
  %2114 = vmatpush.bf16.msra.mxu0 %v1695
  %2115 = vmatpush.bf16.msra.mxu0 %v1679
  %2116 = vmatpush.bf16.msra.mxu0 %v1663
  %2117 = vmatpush.bf16.msra.mxu0 %v1647
  %2118 = vmatpush.bf16.msra.mxu0 %v1631
  %2119 = vmatpush.bf16.msra.mxu0 %v1615
  %2120 = vmatmul.bf16.gmra.mxu0 %v712
  %v2121 = vpop.f32.mrf.mxu0
  %v2122 = vadd.f32 %v2109, %v2121
  %v2123 = vpop.f32.mrf.mxu0
  %2124 = vdwg.mxu0
  %2125 = vmatpush.bf16.msra.mxu0 %v1600
  %2126 = vmatpush.bf16.msra.mxu0 %v1584
  %2127 = vmatpush.bf16.msra.mxu0 %v1568
  %2128 = vmatpush.bf16.msra.mxu0 %v1552
  %2129 = vmatpush.bf16.msra.mxu0 %v1536
  %2130 = vmatpush.bf16.msra.mxu0 %v1520
  %2131 = vmatpush.bf16.msra.mxu0 %v1504
  %2132 = vmatpush.bf16.msra.mxu0 %v1488
  %2133 = vmatmul.bf16.gmra.mxu0 %v711
  %v2134 = vpop.f32.mrf.mxu0
  %v2135 = vadd.f32 0.0, %v2134
  %v2136 = vpop.f32.mrf.mxu0
  %2137 = vdwg.mxu0
  %2138 = vmatpush.bf16.msra.mxu0 %v1728
  %2139 = vmatpush.bf16.msra.mxu0 %v1712
  %2140 = vmatpush.bf16.msra.mxu0 %v1696
  %2141 = vmatpush.bf16.msra.mxu0 %v1680
  %2142 = vmatpush.bf16.msra.mxu0 %v1664
  %2143 = vmatpush.bf16.msra.mxu0 %v1648
  %2144 = vmatpush.bf16.msra.mxu0 %v1632
  %2145 = vmatpush.bf16.msra.mxu0 %v1616
  %2146 = vmatmul.bf16.gmra.mxu0 %v712
  %v2147 = vpop.f32.mrf.mxu0
  %v2148 = vadd.f32 %v2135, %v2147
  %v2149 = vpop.f32.mrf.mxu0
  %2150 = vdwg.mxu0
  %2151 = vmatpush.bf16.msra.mxu0 %v1601
  %2152 = vmatpush.bf16.msra.mxu0 %v1585
  %2153 = vmatpush.bf16.msra.mxu0 %v1569
  %2154 = vmatpush.bf16.msra.mxu0 %v1553
  %2155 = vmatpush.bf16.msra.mxu0 %v1537
  %2156 = vmatpush.bf16.msra.mxu0 %v1521
  %2157 = vmatpush.bf16.msra.mxu0 %v1505
  %2158 = vmatpush.bf16.msra.mxu0 %v1489
  %2159 = vmatmul.bf16.gmra.mxu0 %v711
  %v2160 = vpop.f32.mrf.mxu0
  %v2161 = vadd.f32 0.0, %v2160
  %v2162 = vpop.f32.mrf.mxu0
  %2163 = vdwg.mxu0
  %2164 = vmatpush.bf16.msra.mxu0 %v1729
  %2165 = vmatpush.bf16.msra.mxu0 %v1713
  %2166 = vmatpush.bf16.msra.mxu0 %v1697
  %2167 = vmatpush.bf16.msra.mxu0 %v1681
  %2168 = vmatpush.bf16.msra.mxu0 %v1665
  %2169 = vmatpush.bf16.msra.mxu0 %v1649
  %2170 = vmatpush.bf16.msra.mxu0 %v1633
  %2171 = vmatpush.bf16.msra.mxu0 %v1617
  %2172 = vmatmul.bf16.gmra.mxu0 %v712
  %v2173 = vpop.f32.mrf.mxu0
  %v2174 = vadd.f32 %v2161, %v2173
  %v2175 = vpop.f32.mrf.mxu0
  %2176 = vdwg.mxu0
  %2177 = vmatpush.bf16.msra.mxu0 %v1602
  %2178 = vmatpush.bf16.msra.mxu0 %v1586
  %2179 = vmatpush.bf16.msra.mxu0 %v1570
  %2180 = vmatpush.bf16.msra.mxu0 %v1554
  %2181 = vmatpush.bf16.msra.mxu0 %v1538
  %2182 = vmatpush.bf16.msra.mxu0 %v1522
  %2183 = vmatpush.bf16.msra.mxu0 %v1506
  %2184 = vmatpush.bf16.msra.mxu0 %v1490
  %2185 = vmatmul.bf16.gmra.mxu0 %v711
  %v2186 = vpop.f32.mrf.mxu0
  %v2187 = vadd.f32 0.0, %v2186
  %v2188 = vpop.f32.mrf.mxu0
  %2189 = vdwg.mxu0
  %2190 = vmatpush.bf16.msra.mxu0 %v1730
  %2191 = vmatpush.bf16.msra.mxu0 %v1714
  %2192 = vmatpush.bf16.msra.mxu0 %v1698
  %2193 = vmatpush.bf16.msra.mxu0 %v1682
  %2194 = vmatpush.bf16.msra.mxu0 %v1666
  %2195 = vmatpush.bf16.msra.mxu0 %v1650
  %2196 = vmatpush.bf16.msra.mxu0 %v1634
  %2197 = vmatpush.bf16.msra.mxu0 %v1618
  %2198 = vmatmul.bf16.gmra.mxu0 %v712
  %v2199 = vpop.f32.mrf.mxu0
  %v2200 = vadd.f32 %v2187, %v2199
  %v2201 = vpop.f32.mrf.mxu0
  %2202 = vdwg.mxu0
  %2203 = vmatpush.bf16.msra.mxu0 %v1603
  %2204 = vmatpush.bf16.msra.mxu0 %v1587
  %2205 = vmatpush.bf16.msra.mxu0 %v1571
  %2206 = vmatpush.bf16.msra.mxu0 %v1555
  %2207 = vmatpush.bf16.msra.mxu0 %v1539
  %2208 = vmatpush.bf16.msra.mxu0 %v1523
  %2209 = vmatpush.bf16.msra.mxu0 %v1507
  %2210 = vmatpush.bf16.msra.mxu0 %v1491
  %2211 = vmatmul.bf16.gmra.mxu0 %v711
  %v2212 = vpop.f32.mrf.mxu0
  %v2213 = vadd.f32 0.0, %v2212
  %v2214 = vpop.f32.mrf.mxu0
  %2215 = vdwg.mxu0
  %2216 = vmatpush.bf16.msra.mxu0 %v1731
  %2217 = vmatpush.bf16.msra.mxu0 %v1715
  %2218 = vmatpush.bf16.msra.mxu0 %v1699
  %2219 = vmatpush.bf16.msra.mxu0 %v1683
  %2220 = vmatpush.bf16.msra.mxu0 %v1667
  %2221 = vmatpush.bf16.msra.mxu0 %v1651
  %2222 = vmatpush.bf16.msra.mxu0 %v1635
  %2223 = vmatpush.bf16.msra.mxu0 %v1619
  %2224 = vmatmul.bf16.gmra.mxu0 %v712
  %v2225 = vpop.f32.mrf.mxu0
  %v2226 = vadd.f32 %v2213, %v2225
  %v2227 = vpop.f32.mrf.mxu0
  %2228 = vdwg.mxu0
  %2229 = vmatpush.bf16.msra.mxu0 %v1604
  %2230 = vmatpush.bf16.msra.mxu0 %v1588
  %2231 = vmatpush.bf16.msra.mxu0 %v1572
  %2232 = vmatpush.bf16.msra.mxu0 %v1556
  %2233 = vmatpush.bf16.msra.mxu0 %v1540
  %2234 = vmatpush.bf16.msra.mxu0 %v1524
  %2235 = vmatpush.bf16.msra.mxu0 %v1508
  %2236 = vmatpush.bf16.msra.mxu0 %v1492
  %2237 = vmatmul.bf16.gmra.mxu0 %v711
  %v2238 = vpop.f32.mrf.mxu0
  %v2239 = vadd.f32 0.0, %v2238
  %v2240 = vpop.f32.mrf.mxu0
  %2241 = vdwg.mxu0
  %2242 = vmatpush.bf16.msra.mxu0 %v1732
  %2243 = vmatpush.bf16.msra.mxu0 %v1716
  %2244 = vmatpush.bf16.msra.mxu0 %v1700
  %2245 = vmatpush.bf16.msra.mxu0 %v1684
  %2246 = vmatpush.bf16.msra.mxu0 %v1668
  %2247 = vmatpush.bf16.msra.mxu0 %v1652
  %2248 = vmatpush.bf16.msra.mxu0 %v1636
  %2249 = vmatpush.bf16.msra.mxu0 %v1620
  %2250 = vmatmul.bf16.gmra.mxu0 %v712
  %v2251 = vpop.f32.mrf.mxu0
  %v2252 = vadd.f32 %v2239, %v2251
  %v2253 = vpop.f32.mrf.mxu0
  %2254 = vdwg.mxu0
  %2255 = vmatpush.bf16.msra.mxu0 %v1605
  %2256 = vmatpush.bf16.msra.mxu0 %v1589
  %2257 = vmatpush.bf16.msra.mxu0 %v1573
  %2258 = vmatpush.bf16.msra.mxu0 %v1557
  %2259 = vmatpush.bf16.msra.mxu0 %v1541
  %2260 = vmatpush.bf16.msra.mxu0 %v1525
  %2261 = vmatpush.bf16.msra.mxu0 %v1509
  %2262 = vmatpush.bf16.msra.mxu0 %v1493
  %2263 = vmatmul.bf16.gmra.mxu0 %v711
  %v2264 = vpop.f32.mrf.mxu0
  %v2265 = vadd.f32 0.0, %v2264
  %v2266 = vpop.f32.mrf.mxu0
  %2267 = vdwg.mxu0
  %2268 = vmatpush.bf16.msra.mxu0 %v1733
  %2269 = vmatpush.bf16.msra.mxu0 %v1717
  %2270 = vmatpush.bf16.msra.mxu0 %v1701
  %2271 = vmatpush.bf16.msra.mxu0 %v1685
  %2272 = vmatpush.bf16.msra.mxu0 %v1669
  %2273 = vmatpush.bf16.msra.mxu0 %v1653
  %2274 = vmatpush.bf16.msra.mxu0 %v1637
  %2275 = vmatpush.bf16.msra.mxu0 %v1621
  %2276 = vmatmul.bf16.gmra.mxu0 %v712
  %v2277 = vpop.f32.mrf.mxu0
  %v2278 = vadd.f32 %v2265, %v2277
  %v2279 = vpop.f32.mrf.mxu0
  %2280 = vdwg.mxu0
  %2281 = vmatpush.bf16.msra.mxu0 %v1606
  %2282 = vmatpush.bf16.msra.mxu0 %v1590
  %2283 = vmatpush.bf16.msra.mxu0 %v1574
  %2284 = vmatpush.bf16.msra.mxu0 %v1558
  %2285 = vmatpush.bf16.msra.mxu0 %v1542
  %2286 = vmatpush.bf16.msra.mxu0 %v1526
  %2287 = vmatpush.bf16.msra.mxu0 %v1510
  %2288 = vmatpush.bf16.msra.mxu0 %v1494
  %2289 = vmatmul.bf16.gmra.mxu0 %v711
  %v2290 = vpop.f32.mrf.mxu0
  %v2291 = vadd.f32 0.0, %v2290
  %v2292 = vpop.f32.mrf.mxu0
  %2293 = vdwg.mxu0
  %2294 = vmatpush.bf16.msra.mxu0 %v1734
  %2295 = vmatpush.bf16.msra.mxu0 %v1718
  %2296 = vmatpush.bf16.msra.mxu0 %v1702
  %2297 = vmatpush.bf16.msra.mxu0 %v1686
  %2298 = vmatpush.bf16.msra.mxu0 %v1670
  %2299 = vmatpush.bf16.msra.mxu0 %v1654
  %2300 = vmatpush.bf16.msra.mxu0 %v1638
  %2301 = vmatpush.bf16.msra.mxu0 %v1622
  %2302 = vmatmul.bf16.gmra.mxu0 %v712
  %v2303 = vpop.f32.mrf.mxu0
  %v2304 = vadd.f32 %v2291, %v2303
  %v2305 = vpop.f32.mrf.mxu0
  %2306 = vdwg.mxu0
  %2307 = vmatpush.bf16.msra.mxu0 %v1607
  %2308 = vmatpush.bf16.msra.mxu0 %v1591
  %2309 = vmatpush.bf16.msra.mxu0 %v1575
  %2310 = vmatpush.bf16.msra.mxu0 %v1559
  %2311 = vmatpush.bf16.msra.mxu0 %v1543
  %2312 = vmatpush.bf16.msra.mxu0 %v1527
  %2313 = vmatpush.bf16.msra.mxu0 %v1511
  %2314 = vmatpush.bf16.msra.mxu0 %v1495
  %2315 = vmatmul.bf16.gmra.mxu0 %v711
  %v2316 = vpop.f32.mrf.mxu0
  %v2317 = vadd.f32 0.0, %v2316
  %v2318 = vpop.f32.mrf.mxu0
  %2319 = vdwg.mxu0
  %2320 = vmatpush.bf16.msra.mxu0 %v1735
  %2321 = vmatpush.bf16.msra.mxu0 %v1719
  %2322 = vmatpush.bf16.msra.mxu0 %v1703
  %2323 = vmatpush.bf16.msra.mxu0 %v1687
  %2324 = vmatpush.bf16.msra.mxu0 %v1671
  %2325 = vmatpush.bf16.msra.mxu0 %v1655
  %2326 = vmatpush.bf16.msra.mxu0 %v1639
  %2327 = vmatpush.bf16.msra.mxu0 %v1623
  %2328 = vmatmul.bf16.gmra.mxu0 %v712
  %v2329 = vpop.f32.mrf.mxu0
  %v2330 = vadd.f32 %v2317, %v2329
  %v2331 = vpop.f32.mrf.mxu0
  %2332 = vdwg.mxu0
  %2333 = vmatpush.bf16.msra.mxu0 %v1608
  %2334 = vmatpush.bf16.msra.mxu0 %v1592
  %2335 = vmatpush.bf16.msra.mxu0 %v1576
  %2336 = vmatpush.bf16.msra.mxu0 %v1560
  %2337 = vmatpush.bf16.msra.mxu0 %v1544
  %2338 = vmatpush.bf16.msra.mxu0 %v1528
  %2339 = vmatpush.bf16.msra.mxu0 %v1512
  %2340 = vmatpush.bf16.msra.mxu0 %v1496
  %2341 = vmatmul.bf16.gmra.mxu0 %v711
  %v2342 = vpop.f32.mrf.mxu0
  %v2343 = vadd.f32 0.0, %v2342
  %v2344 = vpop.f32.mrf.mxu0
  %2345 = vdwg.mxu0
  %2346 = vmatpush.bf16.msra.mxu0 %v1736
  %2347 = vmatpush.bf16.msra.mxu0 %v1720
  %2348 = vmatpush.bf16.msra.mxu0 %v1704
  %2349 = vmatpush.bf16.msra.mxu0 %v1688
  %2350 = vmatpush.bf16.msra.mxu0 %v1672
  %2351 = vmatpush.bf16.msra.mxu0 %v1656
  %2352 = vmatpush.bf16.msra.mxu0 %v1640
  %2353 = vmatpush.bf16.msra.mxu0 %v1624
  %2354 = vmatmul.bf16.gmra.mxu0 %v712
  %v2355 = vpop.f32.mrf.mxu0
  %v2356 = vadd.f32 %v2343, %v2355
  %v2357 = vpop.f32.mrf.mxu0
  %2358 = vdwg.mxu0
  %2359 = vmatpush.bf16.msra.mxu0 %v1609
  %2360 = vmatpush.bf16.msra.mxu0 %v1593
  %2361 = vmatpush.bf16.msra.mxu0 %v1577
  %2362 = vmatpush.bf16.msra.mxu0 %v1561
  %2363 = vmatpush.bf16.msra.mxu0 %v1545
  %2364 = vmatpush.bf16.msra.mxu0 %v1529
  %2365 = vmatpush.bf16.msra.mxu0 %v1513
  %2366 = vmatpush.bf16.msra.mxu0 %v1497
  %2367 = vmatmul.bf16.gmra.mxu0 %v711
  %v2368 = vpop.f32.mrf.mxu0
  %v2369 = vadd.f32 0.0, %v2368
  %v2370 = vpop.f32.mrf.mxu0
  %2371 = vdwg.mxu0
  %2372 = vmatpush.bf16.msra.mxu0 %v1737
  %2373 = vmatpush.bf16.msra.mxu0 %v1721
  %2374 = vmatpush.bf16.msra.mxu0 %v1705
  %2375 = vmatpush.bf16.msra.mxu0 %v1689
  %2376 = vmatpush.bf16.msra.mxu0 %v1673
  %2377 = vmatpush.bf16.msra.mxu0 %v1657
  %2378 = vmatpush.bf16.msra.mxu0 %v1641
  %2379 = vmatpush.bf16.msra.mxu0 %v1625
  %2380 = vmatmul.bf16.gmra.mxu0 %v712
  %v2381 = vpop.f32.mrf.mxu0
  %v2382 = vadd.f32 %v2369, %v2381
  %v2383 = vpop.f32.mrf.mxu0
  %2384 = vdwg.mxu0
  %2385 = vmatpush.bf16.msra.mxu0 %v1610
  %2386 = vmatpush.bf16.msra.mxu0 %v1594
  %2387 = vmatpush.bf16.msra.mxu0 %v1578
  %2388 = vmatpush.bf16.msra.mxu0 %v1562
  %2389 = vmatpush.bf16.msra.mxu0 %v1546
  %2390 = vmatpush.bf16.msra.mxu0 %v1530
  %2391 = vmatpush.bf16.msra.mxu0 %v1514
  %2392 = vmatpush.bf16.msra.mxu0 %v1498
  %2393 = vmatmul.bf16.gmra.mxu0 %v711
  %v2394 = vpop.f32.mrf.mxu0
  %v2395 = vadd.f32 0.0, %v2394
  %v2396 = vpop.f32.mrf.mxu0
  %2397 = vdwg.mxu0
  %2398 = vmatpush.bf16.msra.mxu0 %v1738
  %2399 = vmatpush.bf16.msra.mxu0 %v1722
  %2400 = vmatpush.bf16.msra.mxu0 %v1706
  %2401 = vmatpush.bf16.msra.mxu0 %v1690
  %2402 = vmatpush.bf16.msra.mxu0 %v1674
  %2403 = vmatpush.bf16.msra.mxu0 %v1658
  %2404 = vmatpush.bf16.msra.mxu0 %v1642
  %2405 = vmatpush.bf16.msra.mxu0 %v1626
  %2406 = vmatmul.bf16.gmra.mxu0 %v712
  %v2407 = vpop.f32.mrf.mxu0
  %v2408 = vadd.f32 %v2395, %v2407
  %v2409 = vpop.f32.mrf.mxu0
  %2410 = vdwg.mxu0
  %2411 = vst [vmem:[%s2] sm:$0xff] %v2018
  %2412 = vst [vmem:[%s2 + $0x8] sm:$0xff] %v2044
  %2413 = vst [vmem:[%s2 + $0x10] sm:$0xff] %v2070
  %2414 = vst [vmem:[%s2 + $0x18] sm:$0xff] %v2096
  %2415 = vst [vmem:[%s2 + $0x20] sm:$0xff] %v2122
  %2416 = vst [vmem:[%s2 + $0x28] sm:$0xff] %v2148
  %2417 = vst [vmem:[%s2 + $0x30] sm:$0xff] %v2174
  %2418 = vst [vmem:[%s2 + $0x38] sm:$0xff] %v2200
  %2419 = vst [vmem:[%s2 + $0x40] sm:$0xff] %v2226
  %2420 = vst [vmem:[%s2 + $0x48] sm:$0xff] %v2252
  %2421 = vst [vmem:[%s2 + $0x50] sm:$0xff] %v2278
  %2422 = vst [vmem:[%s2 + $0x58] sm:$0xff] %v2304
  %2423 = vst [vmem:[%s2 + $0x60] sm:$0xff] %v2330
  %2424 = vst [vmem:[%s2 + $0x68] sm:$0xff] %v2356
  %2425 = vst [vmem:[%s2 + $0x70] sm:$0xff] %v2382
  %2426 = vst [vmem:[%s2 + $0x78] sm:$0xff] %v2408
  // Predicated region
  $region10: #{partial_inception_network.1} parent=0 // pred_check
    _
  $region11: #{partial_inception_network.1} parent=0 // pred_check_branch
    %2428 = sbr.rel (0) target = $region13
  $region12: #{partial_inception_network.1} parent=0 // pred_region
    _
  $region13: #{partial_inception_network.1} parent=0 // pred_fallthru
    _
  // Predicated region
  $region14: #{partial_inception_network.1} parent=0 // pred_check
    _
  $region15: #{partial_inception_network.1} parent=0 // pred_check_branch
    %2430 = sbr.rel (0) target = $region17
  $region16: #{partial_inception_network.1} parent=0 // pred_region
    _
  $region17: #{partial_inception_network.1} parent=0 // pred_fallthru
    _

</llo_original>
